<compile_context>
chip_gen: v5e
topology: v5e:2x2
jax: 0.10.0
libtpu: 0.0.40
codegen_flags: <defaults>
</compile_context>

<pallas_src>
import jax
import jax.numpy as jnp
from jax import lax
from jax.experimental import pallas as pl
from jax.experimental.pallas import tpu as pltpu


def disc_kernel(emb_ref,            # (T_CHUNK, TB, E)        compute dtype
                w_i_ref, w_h_ref,   # (E, 3H), (H, 3H)        compute dtype
                b_i_ref, b_hn_ref,  # (1, 3H), (1, H)         f32
                w1_ref, b1_ref,     # (H, H) cdt, (1, H) f32
                w2_ref, b2_ref,     # (1, H) f32, (1, 1) f32
                out_ref,            # (TB, 1)                 f32
                xg_scratch,         # (T_CHUNK*TB, 3H)        f32
                h_scratch):         # (TB, H)                 f32
    c = pl.program_id(1)                      # time-chunk index (sequential)
    T, TB, E = emb_ref.shape
    H = h_scratch.shape[1]
    cdt = w_h_ref.dtype

    @pl.when(c == 0)
    def _():
        # hidden=None in the PyTorch forward -> zero initial hidden state,
        # re-zeroed at chunk 0 of every batch block.
        h_scratch[...] = jnp.zeros_like(h_scratch)

    # Grid-invariant loads / broadcasts hoisted out of the time loop.
    w_h = w_h_ref[...]                                       # (H, 3H)
    b_hn = jnp.broadcast_to(b_hn_ref[...], (TB, H))          # (TB, H)

    # ---- Hoisted input projection: x @ W_i does not depend on h, so compute
    # ---- all T_CHUNK steps with ONE MXU matmul per chunk (fills MXU rows).
    x_all = emb_ref[...].reshape(T * TB, E)                  # collapse leading dims
    xg_scratch[...] = (
        jnp.dot(x_all, w_i_ref[...], preferred_element_type=jnp.float32)
        + b_i_ref[...]                                       # folded b_i* + b_h{r,z}
    )                                                        # (T*TB, 3H) f32

    def step(i, h):
        xg = xg_scratch[pl.ds(i * TB, TB), :]                # (TB, 3H) f32
        hg = jnp.dot(h.astype(cdt), w_h,
                     preferred_element_type=jnp.float32)     # (TB, 3H) f32
        # PyTorch GRU gate order (r, z, n); r and z share one fused sigmoid.
        rz = jax.nn.sigmoid(xg[:, :2 * H] + hg[:, :2 * H])
        r = rz[:, :H]
        z = rz[:, H:]
        n = jnp.tanh(xg[:, 2 * H:] + r * (hg[:, 2 * H:] + b_hn))
        return (1.0 - z) * n + z * h

    h_scratch[...] = lax.fori_loop(0, T, step, h_scratch[...],
                                   unroll=True if T <= 8 else 8)

    @pl.when(c == pl.num_programs(1) - 1)
    def _():
        hid = h_scratch[...]                                 # (TB, H)
        o1 = jnp.tanh(jnp.dot(hid.astype(w1_ref.dtype), w1_ref[...],
                              preferred_element_type=jnp.float32) + b1_ref[...])
        # dropout_linear: identity at inference.
        # hidden2out (H -> 1): VPU multiply + lane reduction (avoids an N=1 MXU
        # matmul and its masked-store epilogue).
        logit = jnp.sum(o1 * w2_ref[...], axis=-1, keepdims=True) + b2_ref[...]
        out_ref[...] = jax.nn.sigmoid(logit)


def _round_up(x, m):
    return (x + m - 1) // m * m


def discriminator_forward(tokens, params, *, compute_dtype=jnp.bfloat16,
                          max_chunk=128):
    """Forward pass of `Discriminator` (eval mode) as a single Pallas kernel."""
    B, S = tokens.shape
    E = params["emb"].shape[1]
    H = params["w_hr"].shape[0]
    cdt = jnp.dtype(compute_dtype)

    # ---- Alignment: pad batch to the sublane granule, E/H to 128 lanes so ---
    # ---- the three gate slices land on vreg lane boundaries.              ---
    sub = 16 if cdt.itemsize < 4 else 8
    e_pad = _round_up(E, 128)
    h_pad = _round_up(H, 128)
    if _round_up(B, sub) <= 128:
        tb = _round_up(B, sub)          # single batch block
    else:
        tb = 128                        # batch-block the grid (v7x: 2 TCs)
    b_pad = _round_up(B, tb)
    nb = b_pad // tb

    # ---- Embedding: gather time-major directly (no full-seq transpose). ----
    emb_tab = jnp.pad(params["emb"], ((0, 0), (0, e_pad - E))).astype(cdt)
    tok_t = jnp.pad(tokens.T, ((0, 0), (0, b_pad - B)))      # (S, B_pad)
    emb = emb_tab[tok_t]                                     # (S, B_pad, E_pad)

    # ---- Fuse gate weights / fold biases; zero-pad to aligned shapes.   ----
    def p2(a, rows, cols):
        return jnp.pad(a, ((0, rows - a.shape[0]), (0, cols - a.shape[1])))

    w_i = jnp.concatenate([p2(params["w_ir"], e_pad, h_pad),
                           p2(params["w_iz"], e_pad, h_pad),
                           p2(params["w_in"], e_pad, h_pad)], axis=1).astype(cdt)
    w_h = jnp.concatenate([p2(params["w_hr"], h_pad, h_pad),
                           p2(params["w_hz"], h_pad, h_pad),
                           p2(params["w_hn"], h_pad, h_pad)], axis=1).astype(cdt)
    b_i = jnp.concatenate([p2(params["b_ir"] + params["b_hr"], 1, h_pad),
                           p2(params["b_iz"] + params["b_hz"], 1, h_pad),
                           p2(params["b_in"], 1, h_pad)], axis=1)    # f32 (1,3H)
    b_hn = p2(params["b_hn"], 1, h_pad)                              # f32 (1,H)
    w1 = p2(params["w1"], h_pad, h_pad).astype(cdt)                  # (H,H)
    b1 = p2(params["b1"], 1, h_pad)                                  # f32 (1,H)
    w2 = p2(params["w2"].T, 1, h_pad)                                # f32 (1,H)
    b2 = params["b2"]                                                # f32 (1,1)
    weights = [w_i, w_h, b_i, b_hn, w1, b1, w2, b2]
    weight_bytes = sum(int(w.size) * w.dtype.itemsize for w in weights)

    # ---- Time chunk from the REAL VMEM footprint (v7x-safe <= 48 MiB). -----
    def footprint(t):
        return (2 * t * tb * e_pad * cdt.itemsize   # emb chunk, double-buffered
                + 2 * weight_bytes                  # weights, double-buffered
                + t * tb * 3 * h_pad * 4            # hoisted xg scratch (f32)
                + tb * h_pad * 4                    # hidden-state scratch
                + 2 * tb * 4                        # output block
                + (1 << 20))                        # slack

    budget = 40 * 1024 * 1024
    t_chunk = 1
    for cand in range(min(S, max_chunk), 0, -1):
        if S % cand == 0 and footprint(cand) <= budget:
            t_chunk = cand
            break
    nc = S // t_chunk
    vmem_limit = int(min(48 * 1024 * 1024,
                         max(16 * 1024 * 1024, footprint(t_chunk) * 5 // 4)))

    def w_map(nd):
        return lambda b, c, _nd=nd: (0,) * _nd

    in_specs = ([pl.BlockSpec((t_chunk, tb, e_pad), lambda b, c: (c, b, 0))]
                + [pl.BlockSpec(w.shape, w_map(w.ndim)) for w in weights])

    out = pl.pallas_call(
        disc_kernel,
        out_shape=jax.ShapeDtypeStruct((b_pad, 1), jnp.float32),
        grid_spec=pltpu.PrefetchScalarGridSpec(
            num_scalar_prefetch=0,
            grid=(nb, nc),
            in_specs=in_specs,
            out_specs=pl.BlockSpec((tb, 1), lambda b, c: (b, 0)),
            scratch_shapes=[pltpu.VMEM((t_chunk * tb, 3 * h_pad), jnp.float32),
                            pltpu.VMEM((tb, h_pad), jnp.float32)]),
        compiler_params=pltpu.CompilerParams(
            dimension_semantics=("parallel", "arbitrary"),
            vmem_limit_bytes=vmem_limit),
    )(emb, *weights)
    return out[:B]


def reference_forward(tokens, params):
    """Pure-JAX reference matching the PyTorch forward (eval mode, f32)."""
    emb = jnp.transpose(params["emb"][tokens], (1, 0, 2))    # (S, B, E)
    B = tokens.shape[0]
    H = params["w_hr"].shape[0]
    h0 = jnp.zeros((B, H), jnp.float32)

    def step(h, x):
        r = jax.nn.sigmoid(x @ params["w_ir"] + params["b_ir"]
                           + h @ params["w_hr"] + params["b_hr"])
        z = jax.nn.sigmoid(x @ params["w_iz"] + params["b_iz"]
                           + h @ params["w_hz"] + params["b_hz"])
        n = jnp.tanh(x @ params["w_in"] + params["b_in"]
                     + r * (h @ params["w_hn"] + params["b_hn"]))
        return (1.0 - z) * n + z * h, None

    h, _ = jax.lax.scan(step, h0, emb)
    o1 = jnp.tanh(h @ params["w1"] + params["b1"])
    return jax.nn.sigmoid(o1 @ params["w2"] + params["b2"])


def init_params(key, vocab_size, embedding_dim, hidden_dim):
    # Deterministic synthetic init (PyTorch-style uniform(-1/sqrt(H), 1/sqrt(H))).
    assert embedding_dim == hidden_dim, \
        "original module only type-checks when embedding_dim == hidden_dim"
    ks = iter(jax.random.split(key, 32))
    s = 1.0 / jnp.sqrt(hidden_dim)

    def u(shape):
        return jax.random.uniform(next(ks), shape, jnp.float32, -s, s)

    p = {"emb": jax.random.normal(next(ks), (vocab_size, embedding_dim),
                                  jnp.float32)}
    for name in ["w_ir", "w_iz", "w_in"]:            # (E, H), pre-transposed
        p[name] = u((embedding_dim, hidden_dim))
    for name in ["w_hr", "w_hz", "w_hn"]:            # (H, H)
        p[name] = u((hidden_dim, hidden_dim))
    for name in ["b_ir", "b_iz", "b_in", "b_hr", "b_hz", "b_hn"]:
        p[name] = u((1, hidden_dim))
    p["w1"] = u((hidden_dim, hidden_dim))            # gru2hidden
    p["b1"] = u((1, hidden_dim))
    p["w2"] = u((hidden_dim, 1))                     # hidden2out
    p["b2"] = u((1, 1))
    return p


if __name__ == "__main__":
    batch, seq_len = 2, 8
    vocab_size, embedding_dim, hidden_dim = 16, 32, 32

    key = jax.random.PRNGKey(0)
    k_tok, k_par = jax.random.split(key)
    tokens = jax.random.randint(k_tok, (batch, seq_len), 0, vocab_size,
                                dtype=jnp.int32)
    params = init_params(k_par, vocab_size, embedding_dim, hidden_dim)

    ref = reference_forward(tokens, params)

    # f32 MXU path: tolerance allows only for summation-order / default TPU
    # matmul-precision differences between the Mosaic kernel and the XLA ref.
    out_f32 = jax.block_until_ready(
        discriminator_forward(tokens, params, compute_dtype=jnp.float32))
    assert out_f32.shape == (batch, 1)
    assert jnp.allclose(out_f32, ref, atol=5e-3, rtol=0.0), (out_f32, ref)

    # bf16 MXU operands with f32 accumulation (the performance-default path).
    out_bf16 = jax.block_until_ready(
        discriminator_forward(tokens, params, compute_dtype=jnp.bfloat16))
    assert out_bf16.shape == (batch, 1)
    assert jnp.allclose(out_bf16, ref, atol=2.5e-2, rtol=0.0), (out_bf16, ref)

    print("KERNEL_OK")
</pallas_src>

<mosaic_0001>
module attributes {stable_mosaic.version = 11 : i64} {
  func.func @disc_kernel(%arg0: i32, %arg1: i32, %arg2: memref<8x8x128xf32, #tpu.memory_space<vmem>>, %arg3: memref<128x384xf32, #tpu.memory_space<vmem>>, %arg4: memref<128x384xf32, #tpu.memory_space<vmem>>, %arg5: memref<1x384xf32, #tpu.memory_space<vmem>>, %arg6: memref<1x128xf32, #tpu.memory_space<vmem>>, %arg7: memref<128x128xf32, #tpu.memory_space<vmem>>, %arg8: memref<1x128xf32, #tpu.memory_space<vmem>>, %arg9: memref<1x128xf32, #tpu.memory_space<vmem>>, %arg10: memref<1x1xf32, #tpu.memory_space<vmem>>, %arg11: memref<8x1xf32, #tpu.memory_space<vmem>>, %arg12: memref<64x384xf32, #tpu.memory_space<vmem>>, %arg13: memref<8x128xf32, #tpu.memory_space<vmem>>) attributes {dimension_semantics = [#tpu.dimension_semantics<parallel>, #tpu.dimension_semantics<arbitrary>], iteration_bounds = array<i64: 1, 1>, scalar_prefetch = 0 : i64, scratch_operands = 2 : i64, tpu.core_type = #tpu.core_type<tc>, window_params = [{transform_indices = @transform_0, window_bounds = array<i64: 8, 8, 128>}, {pipeline_mode = #tpu.pipeline_mode<synchronous>, transform_indices = @transform_1, window_bounds = array<i64: 128, 384>}, {pipeline_mode = #tpu.pipeline_mode<synchronous>, transform_indices = @transform_2, window_bounds = array<i64: 128, 384>}, {pipeline_mode = #tpu.pipeline_mode<synchronous>, transform_indices = @transform_3, window_bounds = array<i64: 1, 384>}, {pipeline_mode = #tpu.pipeline_mode<synchronous>, transform_indices = @transform_4, window_bounds = array<i64: 1, 128>}, {pipeline_mode = #tpu.pipeline_mode<synchronous>, transform_indices = @transform_5, window_bounds = array<i64: 128, 128>}, {pipeline_mode = #tpu.pipeline_mode<synchronous>, transform_indices = @transform_6, window_bounds = array<i64: 1, 128>}, {pipeline_mode = #tpu.pipeline_mode<synchronous>, transform_indices = @transform_7, window_bounds = array<i64: 1, 128>}, {pipeline_mode = #tpu.pipeline_mode<synchronous>, transform_indices = @transform_8, window_bounds = array<i64: 1, 1>}, {transform_indices = @transform_9, window_bounds = array<i64: 8, 1>}]} {
    %c0_i32 = arith.constant 0 : i32
    %0 = arith.cmpi eq, %arg1, %c0_i32 : i32
    %1 = arith.extui %0 : i1 to i32
    %c0_i32_0 = arith.constant 0 : i32
    %2 = arith.cmpi ne, %1, %c0_i32_0 : i32
    scf.if %2 {
      %cst_60 = arith.constant 0.000000e+00 : f32
      %220 = vector.broadcast %cst_60 : f32 to vector<8x128xf32>
      %c0_61 = arith.constant 0 : index
      %c0_62 = arith.constant 0 : index
      %221 = vector.load %arg13[%c0_61, %c0_62] : memref<8x128xf32, #tpu.memory_space<vmem>>, vector<8x128xf32>
      tpu.vector_store %arg13[%c0_61, %c0_62], %220 {strides = array<i32>} : memref<8x128xf32, #tpu.memory_space<vmem>>, vector<8x128xf32>,
    } else {
    }
    %c0 = arith.constant 0 : index
    %c0_1 = arith.constant 0 : index
    %3 = vector.load %arg4[%c0, %c0_1] : memref<128x384xf32, #tpu.memory_space<vmem>>, vector<128x384xf32>
    %c0_2 = arith.constant 0 : index
    %c0_3 = arith.constant 0 : index
    %4 = vector.load %arg6[%c0_2, %c0_3] : memref<1x128xf32, #tpu.memory_space<vmem>>, vector<1x128xf32>
    %5 = vector.shape_cast %4 : vector<1x128xf32> to vector<1x128xf32>
    %6 = vector.broadcast %5 : vector<1x128xf32> to vector<8x128xf32>
    %c0_4 = arith.constant 0 : index
    %c0_5 = arith.constant 0 : index
    %c0_6 = arith.constant 0 : index
    %7 = vector.load %arg2[%c0_4, %c0_5, %c0_6] : memref<8x8x128xf32, #tpu.memory_space<vmem>>, vector<8x8x128xf32>
    %8 = vector.shape_cast %7 : vector<8x8x128xf32> to vector<64x128xf32>
    %c0_7 = arith.constant 0 : index
    %c0_8 = arith.constant 0 : index
    %9 = vector.load %arg3[%c0_7, %c0_8] : memref<128x384xf32, #tpu.memory_space<vmem>>, vector<128x384xf32>
    %cst = arith.constant dense<0.000000e+00> : vector<64x384xf32>
    %10 = tpu.matmul %8, %9, %cst {dimension_numbers = #tpu.dot_dimension_numbers<[1], [0], [0], [1], [0, 0, 1, 1], [], []>} : vector<64x128xf32>, vector<128x384xf32>, vector<64x384xf32> -> vector<64x384xf32>
    %c0_9 = arith.constant 0 : index
    %c0_10 = arith.constant 0 : index
    %11 = vector.load %arg5[%c0_9, %c0_10] : memref<1x384xf32, #tpu.memory_space<vmem>>, vector<1x384xf32>
    %12 = vector.broadcast %11 : vector<1x384xf32> to vector<64x384xf32>
    %13 = arith.addf %10, %12 : vector<64x384xf32>
    %c0_11 = arith.constant 0 : index
    %c0_12 = arith.constant 0 : index
    %14 = vector.load %arg12[%c0_11, %c0_12] : memref<64x384xf32, #tpu.memory_space<vmem>>, vector<64x384xf32>
    tpu.vector_store %arg12[%c0_11, %c0_12], %13 {strides = array<i32>} : memref<64x384xf32, #tpu.memory_space<vmem>>, vector<64x384xf32>,
    %c0_13 = arith.constant 0 : index
    %c0_14 = arith.constant 0 : index
    %15 = vector.load %arg13[%c0_13, %c0_14] : memref<8x128xf32, #tpu.memory_space<vmem>>, vector<8x128xf32>
    %c0_i32_15 = arith.constant 0 : i32
    %c8_i32 = arith.constant 8 : i32
    %16 = arith.muli %c0_i32_15, %c8_i32 : i32
    %17 = arith.index_cast %16 : i32 to index
    %c0_16 = arith.constant 0 : index
    %18 = vector.load %arg12[%17, %c0_16] : memref<64x384xf32, #tpu.memory_space<vmem>>, vector<8x384xf32>
    %cst_17 = arith.constant dense<0.000000e+00> : vector<8x384xf32>
    %19 = tpu.matmul %15, %3, %cst_17 {dimension_numbers = #tpu.dot_dimension_numbers<[1], [0], [0], [1], [0, 0, 1, 1], [], []>} : vector<8x128xf32>, vector<128x384xf32>, vector<8x384xf32> -> vector<8x384xf32>
    %20 = vector.extract_strided_slice %18 {offsets = [0, 0], sizes = [8, 256], strides = [1, 1]} : vector<8x384xf32> to vector<8x256xf32>
    %21 = vector.extract_strided_slice %19 {offsets = [0, 0], sizes = [8, 256], strides = [1, 1]} : vector<8x384xf32> to vector<8x256xf32>
    %22 = arith.addf %20, %21 : vector<8x256xf32>
    %23 = arith.negf %22 : vector<8x256xf32>
    %24 = math.exp %23 : vector<8x256xf32>
    %cst_18 = arith.constant 1.000000e+00 : f32
    %25 = vector.broadcast %cst_18 : f32 to vector<8x256xf32>
    %26 = arith.addf %25, %24 : vector<8x256xf32>
    %27 = arith.divf %25, %26 : vector<8x256xf32>
    %28 = vector.extract_strided_slice %27 {offsets = [0, 0], sizes = [8, 128], strides = [1, 1]} : vector<8x256xf32> to vector<8x128xf32>
    %29 = vector.extract_strided_slice %27 {offsets = [0, 128], sizes = [8, 128], strides = [1, 1]} : vector<8x256xf32> to vector<8x128xf32>
    %30 = vector.extract_strided_slice %18 {offsets = [0, 256], sizes = [8, 128], strides = [1, 1]} : vector<8x384xf32> to vector<8x128xf32>
    %31 = vector.extract_strided_slice %19 {offsets = [0, 256], sizes = [8, 128], strides = [1, 1]} : vector<8x384xf32> to vector<8x128xf32>
    %32 = arith.addf %31, %6 : vector<8x128xf32>
    %33 = arith.mulf %28, %32 : vector<8x128xf32>
    %34 = arith.addf %30, %33 : vector<8x128xf32>
    %35 = math.tanh %34 : vector<8x128xf32>
    %cst_19 = arith.constant 1.000000e+00 : f32
    %36 = vector.broadcast %cst_19 : f32 to vector<8x128xf32>
    %37 = arith.subf %36, %29 : vector<8x128xf32>
    %38 = arith.mulf %37, %35 : vector<8x128xf32>
    %39 = arith.mulf %29, %15 : vector<8x128xf32>
    %40 = arith.addf %38, %39 : vector<8x128xf32>
    %c1_i32 = arith.constant 1 : i32
    %c8_i32_20 = arith.constant 8 : i32
    %41 = arith.muli %c1_i32, %c8_i32_20 : i32
    %42 = arith.index_cast %41 : i32 to index
    %c0_21 = arith.constant 0 : index
    %43 = vector.load %arg12[%42, %c0_21] : memref<64x384xf32, #tpu.memory_space<vmem>>, vector<8x384xf32>
    %cst_22 = arith.constant dense<0.000000e+00> : vector<8x384xf32>
    %44 = tpu.matmul %40, %3, %cst_22 {dimension_numbers = #tpu.dot_dimension_numbers<[1], [0], [0], [1], [0, 0, 1, 1], [], []>} : vector<8x128xf32>, vector<128x384xf32>, vector<8x384xf32> -> vector<8x384xf32>
    %45 = vector.extract_strided_slice %43 {offsets = [0, 0], sizes = [8, 256], strides = [1, 1]} : vector<8x384xf32> to vector<8x256xf32>
    %46 = vector.extract_strided_slice %44 {offsets = [0, 0], sizes = [8, 256], strides = [1, 1]} : vector<8x384xf32> to vector<8x256xf32>
    %47 = arith.addf %45, %46 : vector<8x256xf32>
    %48 = arith.negf %47 : vector<8x256xf32>
    %49 = math.exp %48 : vector<8x256xf32>
    %cst_23 = arith.constant 1.000000e+00 : f32
    %50 = vector.broadcast %cst_23 : f32 to vector<8x256xf32>
    %51 = arith.addf %50, %49 : vector<8x256xf32>
    %52 = arith.divf %50, %51 : vector<8x256xf32>
    %53 = vector.extract_strided_slice %52 {offsets = [0, 0], sizes = [8, 128], strides = [1, 1]} : vector<8x256xf32> to vector<8x128xf32>
    %54 = vector.extract_strided_slice %52 {offsets = [0, 128], sizes = [8, 128], strides = [1, 1]} : vector<8x256xf32> to vector<8x128xf32>
    %55 = vector.extract_strided_slice %43 {offsets = [0, 256], sizes = [8, 128], strides = [1, 1]} : vector<8x384xf32> to vector<8x128xf32>
    %56 = vector.extract_strided_slice %44 {offsets = [0, 256], sizes = [8, 128], strides = [1, 1]} : vector<8x384xf32> to vector<8x128xf32>
    %57 = arith.addf %56, %6 : vector<8x128xf32>
    %58 = arith.mulf %53, %57 : vector<8x128xf32>
    %59 = arith.addf %55, %58 : vector<8x128xf32>
    %60 = math.tanh %59 : vector<8x128xf32>
    %cst_24 = arith.constant 1.000000e+00 : f32
    %61 = vector.broadcast %cst_24 : f32 to vector<8x128xf32>
    %62 = arith.subf %61, %54 : vector<8x128xf32>
    %63 = arith.mulf %62, %60 : vector<8x128xf32>
    %64 = arith.mulf %54, %40 : vector<8x128xf32>
    %65 = arith.addf %63, %64 : vector<8x128xf32>
    %c2_i32 = arith.constant 2 : i32
    %c8_i32_25 = arith.constant 8 : i32
    %66 = arith.muli %c2_i32, %c8_i32_25 : i32
    %67 = arith.index_cast %66 : i32 to index
    %c0_26 = arith.constant 0 : index
    %68 = vector.load %arg12[%67, %c0_26] : memref<64x384xf32, #tpu.memory_space<vmem>>, vector<8x384xf32>
    %cst_27 = arith.constant dense<0.000000e+00> : vector<8x384xf32>
    %69 = tpu.matmul %65, %3, %cst_27 {dimension_numbers = #tpu.dot_dimension_numbers<[1], [0], [0], [1], [0, 0, 1, 1], [], []>} : vector<8x128xf32>, vector<128x384xf32>, vector<8x384xf32> -> vector<8x384xf32>
    %70 = vector.extract_strided_slice %68 {offsets = [0, 0], sizes = [8, 256], strides = [1, 1]} : vector<8x384xf32> to vector<8x256xf32>
    %71 = vector.extract_strided_slice %69 {offsets = [0, 0], sizes = [8, 256], strides = [1, 1]} : vector<8x384xf32> to vector<8x256xf32>
    %72 = arith.addf %70, %71 : vector<8x256xf32>
    %73 = arith.negf %72 : vector<8x256xf32>
    %74 = math.exp %73 : vector<8x256xf32>
    %cst_28 = arith.constant 1.000000e+00 : f32
    %75 = vector.broadcast %cst_28 : f32 to vector<8x256xf32>
    %76 = arith.addf %75, %74 : vector<8x256xf32>
    %77 = arith.divf %75, %76 : vector<8x256xf32>
    %78 = vector.extract_strided_slice %77 {offsets = [0, 0], sizes = [8, 128], strides = [1, 1]} : vector<8x256xf32> to vector<8x128xf32>
    %79 = vector.extract_strided_slice %77 {offsets = [0, 128], sizes = [8, 128], strides = [1, 1]} : vector<8x256xf32> to vector<8x128xf32>
    %80 = vector.extract_strided_slice %68 {offsets = [0, 256], sizes = [8, 128], strides = [1, 1]} : vector<8x384xf32> to vector<8x128xf32>
    %81 = vector.extract_strided_slice %69 {offsets = [0, 256], sizes = [8, 128], strides = [1, 1]} : vector<8x384xf32> to vector<8x128xf32>
    %82 = arith.addf %81, %6 : vector<8x128xf32>
    %83 = arith.mulf %78, %82 : vector<8x128xf32>
    %84 = arith.addf %80, %83 : vector<8x128xf32>
    %85 = math.tanh %84 : vector<8x128xf32>
    %cst_29 = arith.constant 1.000000e+00 : f32
    %86 = vector.broadcast %cst_29 : f32 to vector<8x128xf32>
    %87 = arith.subf %86, %79 : vector<8x128xf32>
    %88 = arith.mulf %87, %85 : vector<8x128xf32>
    %89 = arith.mulf %79, %65 : vector<8x128xf32>
    %90 = arith.addf %88, %89 : vector<8x128xf32>
    %c3_i32 = arith.constant 3 : i32
    %c8_i32_30 = arith.constant 8 : i32
    %91 = arith.muli %c3_i32, %c8_i32_30 : i32
    %92 = arith.index_cast %91 : i32 to index
    %c0_31 = arith.constant 0 : index
    %93 = vector.load %arg12[%92, %c0_31] : memref<64x384xf32, #tpu.memory_space<vmem>>, vector<8x384xf32>
    %cst_32 = arith.constant dense<0.000000e+00> : vector<8x384xf32>
    %94 = tpu.matmul %90, %3, %cst_32 {dimension_numbers = #tpu.dot_dimension_numbers<[1], [0], [0], [1], [0, 0, 1, 1], [], []>} : vector<8x128xf32>, vector<128x384xf32>, vector<8x384xf32> -> vector<8x384xf32>
    %95 = vector.extract_strided_slice %93 {offsets = [0, 0], sizes = [8, 256], strides = [1, 1]} : vector<8x384xf32> to vector<8x256xf32>
    %96 = vector.extract_strided_slice %94 {offsets = [0, 0], sizes = [8, 256], strides = [1, 1]} : vector<8x384xf32> to vector<8x256xf32>
    %97 = arith.addf %95, %96 : vector<8x256xf32>
    %98 = arith.negf %97 : vector<8x256xf32>
    %99 = math.exp %98 : vector<8x256xf32>
    %cst_33 = arith.constant 1.000000e+00 : f32
    %100 = vector.broadcast %cst_33 : f32 to vector<8x256xf32>
    %101 = arith.addf %100, %99 : vector<8x256xf32>
    %102 = arith.divf %100, %101 : vector<8x256xf32>
    %103 = vector.extract_strided_slice %102 {offsets = [0, 0], sizes = [8, 128], strides = [1, 1]} : vector<8x256xf32> to vector<8x128xf32>
    %104 = vector.extract_strided_slice %102 {offsets = [0, 128], sizes = [8, 128], strides = [1, 1]} : vector<8x256xf32> to vector<8x128xf32>
    %105 = vector.extract_strided_slice %93 {offsets = [0, 256], sizes = [8, 128], strides = [1, 1]} : vector<8x384xf32> to vector<8x128xf32>
    %106 = vector.extract_strided_slice %94 {offsets = [0, 256], sizes = [8, 128], strides = [1, 1]} : vector<8x384xf32> to vector<8x128xf32>
    %107 = arith.addf %106, %6 : vector<8x128xf32>
    %108 = arith.mulf %103, %107 : vector<8x128xf32>
    %109 = arith.addf %105, %108 : vector<8x128xf32>
    %110 = math.tanh %109 : vector<8x128xf32>
    %cst_34 = arith.constant 1.000000e+00 : f32
    %111 = vector.broadcast %cst_34 : f32 to vector<8x128xf32>
    %112 = arith.subf %111, %104 : vector<8x128xf32>
    %113 = arith.mulf %112, %110 : vector<8x128xf32>
    %114 = arith.mulf %104, %90 : vector<8x128xf32>
    %115 = arith.addf %113, %114 : vector<8x128xf32>
    %c4_i32 = arith.constant 4 : i32
    %c8_i32_35 = arith.constant 8 : i32
    %116 = arith.muli %c4_i32, %c8_i32_35 : i32
    %117 = arith.index_cast %116 : i32 to index
    %c0_36 = arith.constant 0 : index
    %118 = vector.load %arg12[%117, %c0_36] : memref<64x384xf32, #tpu.memory_space<vmem>>, vector<8x384xf32>
    %cst_37 = arith.constant dense<0.000000e+00> : vector<8x384xf32>
    %119 = tpu.matmul %115, %3, %cst_37 {dimension_numbers = #tpu.dot_dimension_numbers<[1], [0], [0], [1], [0, 0, 1, 1], [], []>} : vector<8x128xf32>, vector<128x384xf32>, vector<8x384xf32> -> vector<8x384xf32>
    %120 = vector.extract_strided_slice %118 {offsets = [0, 0], sizes = [8, 256], strides = [1, 1]} : vector<8x384xf32> to vector<8x256xf32>
    %121 = vector.extract_strided_slice %119 {offsets = [0, 0], sizes = [8, 256], strides = [1, 1]} : vector<8x384xf32> to vector<8x256xf32>
    %122 = arith.addf %120, %121 : vector<8x256xf32>
    %123 = arith.negf %122 : vector<8x256xf32>
    %124 = math.exp %123 : vector<8x256xf32>
    %cst_38 = arith.constant 1.000000e+00 : f32
    %125 = vector.broadcast %cst_38 : f32 to vector<8x256xf32>
    %126 = arith.addf %125, %124 : vector<8x256xf32>
    %127 = arith.divf %125, %126 : vector<8x256xf32>
    %128 = vector.extract_strided_slice %127 {offsets = [0, 0], sizes = [8, 128], strides = [1, 1]} : vector<8x256xf32> to vector<8x128xf32>
    %129 = vector.extract_strided_slice %127 {offsets = [0, 128], sizes = [8, 128], strides = [1, 1]} : vector<8x256xf32> to vector<8x128xf32>
    %130 = vector.extract_strided_slice %118 {offsets = [0, 256], sizes = [8, 128], strides = [1, 1]} : vector<8x384xf32> to vector<8x128xf32>
    %131 = vector.extract_strided_slice %119 {offsets = [0, 256], sizes = [8, 128], strides = [1, 1]} : vector<8x384xf32> to vector<8x128xf32>
    %132 = arith.addf %131, %6 : vector<8x128xf32>
    %133 = arith.mulf %128, %132 : vector<8x128xf32>
    %134 = arith.addf %130, %133 : vector<8x128xf32>
    %135 = math.tanh %134 : vector<8x128xf32>
    %cst_39 = arith.constant 1.000000e+00 : f32
    %136 = vector.broadcast %cst_39 : f32 to vector<8x128xf32>
    %137 = arith.subf %136, %129 : vector<8x128xf32>
    %138 = arith.mulf %137, %135 : vector<8x128xf32>
    %139 = arith.mulf %129, %115 : vector<8x128xf32>
    %140 = arith.addf %138, %139 : vector<8x128xf32>
    %c5_i32 = arith.constant 5 : i32
    %c8_i32_40 = arith.constant 8 : i32
    %141 = arith.muli %c5_i32, %c8_i32_40 : i32
    %142 = arith.index_cast %141 : i32 to index
    %c0_41 = arith.constant 0 : index
    %143 = vector.load %arg12[%142, %c0_41] : memref<64x384xf32, #tpu.memory_space<vmem>>, vector<8x384xf32>
    %cst_42 = arith.constant dense<0.000000e+00> : vector<8x384xf32>
    %144 = tpu.matmul %140, %3, %cst_42 {dimension_numbers = #tpu.dot_dimension_numbers<[1], [0], [0], [1], [0, 0, 1, 1], [], []>} : vector<8x128xf32>, vector<128x384xf32>, vector<8x384xf32> -> vector<8x384xf32>
    %145 = vector.extract_strided_slice %143 {offsets = [0, 0], sizes = [8, 256], strides = [1, 1]} : vector<8x384xf32> to vector<8x256xf32>
    %146 = vector.extract_strided_slice %144 {offsets = [0, 0], sizes = [8, 256], strides = [1, 1]} : vector<8x384xf32> to vector<8x256xf32>
    %147 = arith.addf %145, %146 : vector<8x256xf32>
    %148 = arith.negf %147 : vector<8x256xf32>
    %149 = math.exp %148 : vector<8x256xf32>
    %cst_43 = arith.constant 1.000000e+00 : f32
    %150 = vector.broadcast %cst_43 : f32 to vector<8x256xf32>
    %151 = arith.addf %150, %149 : vector<8x256xf32>
    %152 = arith.divf %150, %151 : vector<8x256xf32>
    %153 = vector.extract_strided_slice %152 {offsets = [0, 0], sizes = [8, 128], strides = [1, 1]} : vector<8x256xf32> to vector<8x128xf32>
    %154 = vector.extract_strided_slice %152 {offsets = [0, 128], sizes = [8, 128], strides = [1, 1]} : vector<8x256xf32> to vector<8x128xf32>
    %155 = vector.extract_strided_slice %143 {offsets = [0, 256], sizes = [8, 128], strides = [1, 1]} : vector<8x384xf32> to vector<8x128xf32>
    %156 = vector.extract_strided_slice %144 {offsets = [0, 256], sizes = [8, 128], strides = [1, 1]} : vector<8x384xf32> to vector<8x128xf32>
    %157 = arith.addf %156, %6 : vector<8x128xf32>
    %158 = arith.mulf %153, %157 : vector<8x128xf32>
    %159 = arith.addf %155, %158 : vector<8x128xf32>
    %160 = math.tanh %159 : vector<8x128xf32>
    %cst_44 = arith.constant 1.000000e+00 : f32
    %161 = vector.broadcast %cst_44 : f32 to vector<8x128xf32>
    %162 = arith.subf %161, %154 : vector<8x128xf32>
    %163 = arith.mulf %162, %160 : vector<8x128xf32>
    %164 = arith.mulf %154, %140 : vector<8x128xf32>
    %165 = arith.addf %163, %164 : vector<8x128xf32>
    %c6_i32 = arith.constant 6 : i32
    %c8_i32_45 = arith.constant 8 : i32
    %166 = arith.muli %c6_i32, %c8_i32_45 : i32
    %167 = arith.index_cast %166 : i32 to index
    %c0_46 = arith.constant 0 : index
    %168 = vector.load %arg12[%167, %c0_46] : memref<64x384xf32, #tpu.memory_space<vmem>>, vector<8x384xf32>
    %cst_47 = arith.constant dense<0.000000e+00> : vector<8x384xf32>
    %169 = tpu.matmul %165, %3, %cst_47 {dimension_numbers = #tpu.dot_dimension_numbers<[1], [0], [0], [1], [0, 0, 1, 1], [], []>} : vector<8x128xf32>, vector<128x384xf32>, vector<8x384xf32> -> vector<8x384xf32>
    %170 = vector.extract_strided_slice %168 {offsets = [0, 0], sizes = [8, 256], strides = [1, 1]} : vector<8x384xf32> to vector<8x256xf32>
    %171 = vector.extract_strided_slice %169 {offsets = [0, 0], sizes = [8, 256], strides = [1, 1]} : vector<8x384xf32> to vector<8x256xf32>
    %172 = arith.addf %170, %171 : vector<8x256xf32>
    %173 = arith.negf %172 : vector<8x256xf32>
    %174 = math.exp %173 : vector<8x256xf32>
    %cst_48 = arith.constant 1.000000e+00 : f32
    %175 = vector.broadcast %cst_48 : f32 to vector<8x256xf32>
    %176 = arith.addf %175, %174 : vector<8x256xf32>
    %177 = arith.divf %175, %176 : vector<8x256xf32>
    %178 = vector.extract_strided_slice %177 {offsets = [0, 0], sizes = [8, 128], strides = [1, 1]} : vector<8x256xf32> to vector<8x128xf32>
    %179 = vector.extract_strided_slice %177 {offsets = [0, 128], sizes = [8, 128], strides = [1, 1]} : vector<8x256xf32> to vector<8x128xf32>
    %180 = vector.extract_strided_slice %168 {offsets = [0, 256], sizes = [8, 128], strides = [1, 1]} : vector<8x384xf32> to vector<8x128xf32>
    %181 = vector.extract_strided_slice %169 {offsets = [0, 256], sizes = [8, 128], strides = [1, 1]} : vector<8x384xf32> to vector<8x128xf32>
    %182 = arith.addf %181, %6 : vector<8x128xf32>
    %183 = arith.mulf %178, %182 : vector<8x128xf32>
    %184 = arith.addf %180, %183 : vector<8x128xf32>
    %185 = math.tanh %184 : vector<8x128xf32>
    %cst_49 = arith.constant 1.000000e+00 : f32
    %186 = vector.broadcast %cst_49 : f32 to vector<8x128xf32>
    %187 = arith.subf %186, %179 : vector<8x128xf32>
    %188 = arith.mulf %187, %185 : vector<8x128xf32>
    %189 = arith.mulf %179, %165 : vector<8x128xf32>
    %190 = arith.addf %188, %189 : vector<8x128xf32>
    %c7_i32 = arith.constant 7 : i32
    %c8_i32_50 = arith.constant 8 : i32
    %191 = arith.muli %c7_i32, %c8_i32_50 : i32
    %192 = arith.index_cast %191 : i32 to index
    %c0_51 = arith.constant 0 : index
    %193 = vector.load %arg12[%192, %c0_51] : memref<64x384xf32, #tpu.memory_space<vmem>>, vector<8x384xf32>
    %cst_52 = arith.constant dense<0.000000e+00> : vector<8x384xf32>
    %194 = tpu.matmul %190, %3, %cst_52 {dimension_numbers = #tpu.dot_dimension_numbers<[1], [0], [0], [1], [0, 0, 1, 1], [], []>} : vector<8x128xf32>, vector<128x384xf32>, vector<8x384xf32> -> vector<8x384xf32>
    %195 = vector.extract_strided_slice %193 {offsets = [0, 0], sizes = [8, 256], strides = [1, 1]} : vector<8x384xf32> to vector<8x256xf32>
    %196 = vector.extract_strided_slice %194 {offsets = [0, 0], sizes = [8, 256], strides = [1, 1]} : vector<8x384xf32> to vector<8x256xf32>
    %197 = arith.addf %195, %196 : vector<8x256xf32>
    %198 = arith.negf %197 : vector<8x256xf32>
    %199 = math.exp %198 : vector<8x256xf32>
    %cst_53 = arith.constant 1.000000e+00 : f32
    %200 = vector.broadcast %cst_53 : f32 to vector<8x256xf32>
    %201 = arith.addf %200, %199 : vector<8x256xf32>
    %202 = arith.divf %200, %201 : vector<8x256xf32>
    %203 = vector.extract_strided_slice %202 {offsets = [0, 0], sizes = [8, 128], strides = [1, 1]} : vector<8x256xf32> to vector<8x128xf32>
    %204 = vector.extract_strided_slice %202 {offsets = [0, 128], sizes = [8, 128], strides = [1, 1]} : vector<8x256xf32> to vector<8x128xf32>
    %205 = vector.extract_strided_slice %193 {offsets = [0, 256], sizes = [8, 128], strides = [1, 1]} : vector<8x384xf32> to vector<8x128xf32>
    %206 = vector.extract_strided_slice %194 {offsets = [0, 256], sizes = [8, 128], strides = [1, 1]} : vector<8x384xf32> to vector<8x128xf32>
    %207 = arith.addf %206, %6 : vector<8x128xf32>
    %208 = arith.mulf %203, %207 : vector<8x128xf32>
    %209 = arith.addf %205, %208 : vector<8x128xf32>
    %210 = math.tanh %209 : vector<8x128xf32>
    %cst_54 = arith.constant 1.000000e+00 : f32
    %211 = vector.broadcast %cst_54 : f32 to vector<8x128xf32>
    %212 = arith.subf %211, %204 : vector<8x128xf32>
    %213 = arith.mulf %212, %210 : vector<8x128xf32>
    %214 = arith.mulf %204, %190 : vector<8x128xf32>
    %215 = arith.addf %213, %214 : vector<8x128xf32>
    %c8_i32_55 = arith.constant 8 : i32
    %c0_56 = arith.constant 0 : index
    %c0_57 = arith.constant 0 : index
    %216 = vector.load %arg13[%c0_56, %c0_57] : memref<8x128xf32, #tpu.memory_space<vmem>>, vector<8x128xf32>
    tpu.vector_store %arg13[%c0_56, %c0_57], %215 {strides = array<i32>} : memref<8x128xf32, #tpu.memory_space<vmem>>, vector<8x128xf32>,
    %c0_i32_58 = arith.constant 0 : i32
    %217 = arith.cmpi eq, %arg1, %c0_i32_58 : i32
    %218 = arith.extui %217 : i1 to i32
    %c0_i32_59 = arith.constant 0 : i32
    %219 = arith.cmpi ne, %218, %c0_i32_59 : i32
    scf.if %219 {
      %c0_60 = arith.constant 0 : index
      %c0_61 = arith.constant 0 : index
      %220 = vector.load %arg13[%c0_60, %c0_61] : memref<8x128xf32, #tpu.memory_space<vmem>>, vector<8x128xf32>
      %c0_62 = arith.constant 0 : index
      %c0_63 = arith.constant 0 : index
      %221 = vector.load %arg7[%c0_62, %c0_63] : memref<128x128xf32, #tpu.memory_space<vmem>>, vector<128x128xf32>
      %cst_64 = arith.constant dense<0.000000e+00> : vector<8x128xf32>
      %222 = tpu.matmul %220, %221, %cst_64 {dimension_numbers = #tpu.dot_dimension_numbers<[1], [0], [0], [1], [0, 0, 1, 1], [], []>} : vector<8x128xf32>, vector<128x128xf32>, vector<8x128xf32> -> vector<8x128xf32>
      %c0_65 = arith.constant 0 : index
      %c0_66 = arith.constant 0 : index
      %223 = vector.load %arg8[%c0_65, %c0_66] : memref<1x128xf32, #tpu.memory_space<vmem>>, vector<1x128xf32>
      %224 = vector.broadcast %223 : vector<1x128xf32> to vector<8x128xf32>
      %225 = arith.addf %222, %224 : vector<8x128xf32>
      %226 = math.tanh %225 : vector<8x128xf32>
      %c0_67 = arith.constant 0 : index
      %c0_68 = arith.constant 0 : index
      %227 = vector.load %arg9[%c0_67, %c0_68] : memref<1x128xf32, #tpu.memory_space<vmem>>, vector<1x128xf32>
      %228 = vector.broadcast %227 : vector<1x128xf32> to vector<8x128xf32>
      %229 = arith.mulf %226, %228 : vector<8x128xf32>
      %cst_69 = arith.constant dense<0.000000e+00> : vector<8xf32>
      %230 = vector.multi_reduction <add>, %229, %cst_69 [1] : vector<8x128xf32> to vector<8xf32>
      %231 = vector.shape_cast %230 : vector<8xf32> to vector<8x1xf32>
      %c0_70 = arith.constant 0 : index
      %c0_71 = arith.constant 0 : index
      %232 = vector.load %arg10[%c0_70, %c0_71] : memref<1x1xf32, #tpu.memory_space<vmem>>, vector<1x1xf32>
      %233 = vector.broadcast %232 : vector<1x1xf32> to vector<8x1xf32>
      %234 = arith.addf %231, %233 : vector<8x1xf32>
      %235 = arith.negf %234 : vector<8x1xf32>
      %236 = math.exp %235 : vector<8x1xf32>
      %cst_72 = arith.constant 1.000000e+00 : f32
      %237 = vector.broadcast %cst_72 : f32 to vector<8x1xf32>
      %238 = arith.addf %237, %236 : vector<8x1xf32>
      %239 = arith.divf %237, %238 : vector<8x1xf32>
      %c0_73 = arith.constant 0 : index
      %c0_74 = arith.constant 0 : index
      %240 = vector.load %arg11[%c0_73, %c0_74] : memref<8x1xf32, #tpu.memory_space<vmem>>, vector<8x1xf32>
      tpu.vector_store %arg11[%c0_73, %c0_74], %239 {strides = array<i32>} : memref<8x1xf32, #tpu.memory_space<vmem>>, vector<8x1xf32>,
    } else {
    }
    return
  }
  func.func @transform_0(%arg0: i32, %arg1: i32) -> (i32, i32, i32) {
    %c0_i32 = arith.constant 0 : i32
    %c0_i32_0 = arith.constant 0 : i32
    return %arg1, %arg0, %c0_i32 : i32, i32, i32
  }
  func.func @transform_1(%arg0: i32, %arg1: i32) -> (i32, i32) {
    %c0_i32 = arith.constant 0 : i32
    %c0_i32_0 = arith.constant 0 : i32
    %c0_i32_1 = arith.constant 0 : i32
    return %c0_i32, %c0_i32_0 : i32, i32
  }
  func.func @transform_2(%arg0: i32, %arg1: i32) -> (i32, i32) {
    %c0_i32 = arith.constant 0 : i32
    %c0_i32_0 = arith.constant 0 : i32
    %c0_i32_1 = arith.constant 0 : i32
    return %c0_i32, %c0_i32_0 : i32, i32
  }
  func.func @transform_3(%arg0: i32, %arg1: i32) -> (i32, i32) {
    %c0_i32 = arith.constant 0 : i32
    %c0_i32_0 = arith.constant 0 : i32
    %c0_i32_1 = arith.constant 0 : i32
    return %c0_i32, %c0_i32_0 : i32, i32
  }
  func.func @transform_4(%arg0: i32, %arg1: i32) -> (i32, i32) {
    %c0_i32 = arith.constant 0 : i32
    %c0_i32_0 = arith.constant 0 : i32
    %c0_i32_1 = arith.constant 0 : i32
    return %c0_i32, %c0_i32_0 : i32, i32
  }
  func.func @transform_5(%arg0: i32, %arg1: i32) -> (i32, i32) {
    %c0_i32 = arith.constant 0 : i32
    %c0_i32_0 = arith.constant 0 : i32
    %c0_i32_1 = arith.constant 0 : i32
    return %c0_i32, %c0_i32_0 : i32, i32
  }
  func.func @transform_6(%arg0: i32, %arg1: i32) -> (i32, i32) {
    %c0_i32 = arith.constant 0 : i32
    %c0_i32_0 = arith.constant 0 : i32
    %c0_i32_1 = arith.constant 0 : i32
    return %c0_i32, %c0_i32_0 : i32, i32
  }
  func.func @transform_7(%arg0: i32, %arg1: i32) -> (i32, i32) {
    %c0_i32 = arith.constant 0 : i32
    %c0_i32_0 = arith.constant 0 : i32
    %c0_i32_1 = arith.constant 0 : i32
    return %c0_i32, %c0_i32_0 : i32, i32
  }
  func.func @transform_8(%arg0: i32, %arg1: i32) -> (i32, i32) {
    %c0_i32 = arith.constant 0 : i32
    %c0_i32_0 = arith.constant 0 : i32
    %c0_i32_1 = arith.constant 0 : i32
    return %c0_i32, %c0_i32_0 : i32, i32
  }
  func.func @transform_9(%arg0: i32, %arg1: i32) -> (i32, i32) {
    %c0_i32 = arith.constant 0 : i32
    %c0_i32_0 = arith.constant 0 : i32
    return %arg0, %c0_i32 : i32, i32
  }
}

</mosaic_0001>

<llo_original>
// kernel: tpu_custom_call.1
$region0: #{tpu_custom_call.1}
  #allocation0 [shape = 'u32[]', space=smem, size = 0x4, offset = 0x4, fixed_abs, tag = 'smem constant byte address 0x4 - core index']
  #allocation1 [shape = 'u32[72,128]{1,0:T(1,128)}', space=vmem, size = 0x9000, scoped, tag = 'internal scratch']
  #allocation2 [shape = 'f32[64,384]{1,0:T(8,128)}', space=vmem, size = 0x18000, scoped, tag = 'scratch operand']
  #allocation3 [shape = 'f32[8,128]{1,0:T(8,128)}', space=vmem, size = 0x1000, scoped, tag = 'scratch operand']
  #allocation4 [shape = 'f32[1,1]{1,0:T(1,128)S(1)}', space=vmem, size = 0x200, scoped, tag = 'scoped memory for tpu_custom_call.1']
  %s0 = inlined_call_operand.hbm [shape: f32[8,8,128], index: 0, kind: input, shape index: {}]
  %s1 = inlined_call_operand.hbm [shape: f32[128,384], index: 1, kind: input, shape index: {}]
  %s2 = inlined_call_operand.hbm [shape: f32[128,384], index: 2, kind: input, shape index: {}]
  %s3 = inlined_call_operand.vmem [shape: f32[1,384], index: 3, kind: input, shape index: {}]
  %s4 = inlined_call_operand.vmem [shape: f32[1,128], index: 4, kind: input, shape index: {}]
  %s5 = inlined_call_operand.hbm [shape: f32[128,128], index: 5, kind: input, shape index: {}]
  %s6 = inlined_call_operand.vmem [shape: f32[1,128], index: 6, kind: input, shape index: {}]
  %s7 = inlined_call_operand.vmem [shape: f32[1,128], index: 7, kind: input, shape index: {}]
  %s8 = inlined_call_operand.<no memory space> [shape: f32[1,1], index: 8, kind: input, shape index: {}]
  %s9 = inlined_call_operand.vmem [shape: f32[8,1], index: 9, kind: output, shape index: {}]
  %s10 = sld [smem:[#allocation0]]
  $region70: #{tpu_custom_call.1} parent=0
    _
  %s12 = ssub.s32 1, %s10
  %s13 = scalar_select 0, %s12, %s10
  %v14 = vstv %s8
  %15 = vst [vmem:[#allocation4] sm:$0x1] %v14
  $region1: #{tpu_custom_call.1} parent=0
    #allocation5 [shape = 'u8[32768]{0}', space=vmem, size = 0x8000, scoped, tag = 'input window, operand 0, single buffered']
    #allocation6 [shape = 's32[1]{0}', space=sflag, size = 0x4, scoped, tag = 'scoped memory for tpu_custom_call.1']
    #allocation7 [shape = 'u8[196608]{0}', space=vmem, size = 0x30000, scoped, tag = 'input window, operand 1, single buffered']
    #allocation8 [shape = 's32[1]{0}', space=sflag, size = 0x4, scoped, tag = 'scoped memory for tpu_custom_call.1']
    #allocation9 [shape = 'u8[196608]{0}', space=vmem, size = 0x30000, scoped, tag = 'input window, operand 2, single buffered']
    #allocation10 [shape = 'u8[65536]{0}', space=vmem, size = 0x10000, scoped, tag = 'input window, operand 5, single buffered']
    #allocation11 [shape = 's32[1]{0}', space=sflag, size = 0x4, scoped, tag = 'scoped memory for tpu_custom_call.1']
    %16 = vsyncpa [#allocation6], 0
    %17 = vsyncpa [#allocation8], 0
    %18 = vsyncpa [#allocation11], 0
    // Predicated region
    $region2: #{tpu_custom_call.1} parent=1 // pred_check
      _
    $region3: #{tpu_custom_call.1} parent=1 // pred_check_branch
      %20 = sbr.rel (0) target = $region5
    $region4: #{tpu_custom_call.1} parent=1 // pred_region
      %22 = vsyncadd [#allocation6], 0
      %s23 = sshll.u32 %s0, 4
      %s24 = int_to_ptr.hbm [resolvable:$true] %s23
      %s25 = sshll.u32 [#allocation5], 4
      %s26 = int_to_ptr.vmem [resolvable:$true] %s25
      %31 = dma.hbm_to_vmem [thread:$0]  %s24, 1024, %s26, [#allocation6], 128, 128, 8
    $region5: #{tpu_custom_call.1} parent=1 // pred_fallthru
      _
    // Predicated region
    $region6: #{tpu_custom_call.1} parent=1 // pred_check
      _
    $region7: #{tpu_custom_call.1} parent=1 // pred_check_branch
      %33 = sbr.rel (0) target = $region9
    $region8: #{tpu_custom_call.1} parent=1 // pred_region
      %35 = vsyncadd [#allocation8], 0
      %s36 = sshll.u32 %s1, 4
      %s37 = int_to_ptr.hbm [resolvable:$true] %s36
      %s38 = sshll.u32 [#allocation7], 4
      %s39 = int_to_ptr.vmem [resolvable:$true] %s38
      %44 = dma.hbm_to_vmem [thread:$0]  %s37, 6144, %s39, [#allocation8], 384, 384, 24
    $region9: #{tpu_custom_call.1} parent=1 // pred_fallthru
      _
    // Predicated region
    $region10: #{tpu_custom_call.1} parent=1 // pred_check
      _
    $region11: #{tpu_custom_call.1} parent=1 // pred_check_branch
      %46 = sbr.rel (0) target = $region13
    $region12: #{tpu_custom_call.1} parent=1 // pred_region
      %48 = vsyncadd [#allocation8], 0
      %s49 = sshll.u32 %s2, 4
      %s50 = int_to_ptr.hbm [resolvable:$true] %s49
      %s51 = sshll.u32 [#allocation9], 4
      %s52 = int_to_ptr.vmem [resolvable:$true] %s51
      %57 = dma.hbm_to_vmem [thread:$0]  %s50, 6144, %s52, [#allocation8], 384, 384, 24
    $region13: #{tpu_custom_call.1} parent=1 // pred_fallthru
      _
    // Predicated region
    $region14: #{tpu_custom_call.1} parent=1 // pred_check
      _
    $region15: #{tpu_custom_call.1} parent=1 // pred_check_branch
      %59 = sbr.rel (0) target = $region17
    $region16: #{tpu_custom_call.1} parent=1 // pred_region
      _
    $region17: #{tpu_custom_call.1} parent=1 // pred_fallthru
      _
    // Predicated region
    $region18: #{tpu_custom_call.1} parent=1 // pred_check
      _
    $region19: #{tpu_custom_call.1} parent=1 // pred_check_branch
      %61 = sbr.rel (0) target = $region21
    $region20: #{tpu_custom_call.1} parent=1 // pred_region
      _
    $region21: #{tpu_custom_call.1} parent=1 // pred_fallthru
      _
    // Predicated region
    $region22: #{tpu_custom_call.1} parent=1 // pred_check
      _
    $region23: #{tpu_custom_call.1} parent=1 // pred_check_branch
      %63 = sbr.rel (0) target = $region25
    $region24: #{tpu_custom_call.1} parent=1 // pred_region
      %65 = vsyncadd [#allocation11], 0
      %s66 = sshll.u32 %s5, 4
      %s67 = int_to_ptr.hbm [resolvable:$true] %s66
      %s68 = sshll.u32 [#allocation10], 4
      %s69 = int_to_ptr.vmem [resolvable:$true] %s68
      %74 = dma.hbm_to_vmem [thread:$0]  %s67, 2048, %s69, [#allocation11], 128, 128, 8
    $region25: #{tpu_custom_call.1} parent=1 // pred_fallthru
      _
    // Predicated region
    $region26: #{tpu_custom_call.1} parent=1 // pred_check
      _
    $region27: #{tpu_custom_call.1} parent=1 // pred_check_branch
      %76 = sbr.rel (0) target = $region29
    $region28: #{tpu_custom_call.1} parent=1 // pred_region
      _
    $region29: #{tpu_custom_call.1} parent=1 // pred_fallthru
      _
    // Predicated region
    $region30: #{tpu_custom_call.1} parent=1 // pred_check
      _
    $region31: #{tpu_custom_call.1} parent=1 // pred_check_branch
      %78 = sbr.rel (0) target = $region33
    $region32: #{tpu_custom_call.1} parent=1 // pred_region
      _
    $region33: #{tpu_custom_call.1} parent=1 // pred_fallthru
      _
    // Predicated region
    $region34: #{tpu_custom_call.1} parent=1 // pred_check
      _
    $region35: #{tpu_custom_call.1} parent=1 // pred_check_branch
      %80 = sbr.rel (0) target = $region37
    $region36: #{tpu_custom_call.1} parent=1 // pred_region
      _
    $region37: #{tpu_custom_call.1} parent=1 // pred_fallthru
      _
    // Predicated region
    $region38: #{tpu_custom_call.1} parent=1 // pred_check
      _
    $region39: #{tpu_custom_call.1} parent=1 // pred_check_branch
      %82 = sbr.rel (0) target = $region41
    $region40: #{tpu_custom_call.1} parent=1 // pred_region
      %84 = dma.done [#allocation6], 1024
    $region41: #{tpu_custom_call.1} parent=1 // pred_fallthru
      _
    // Predicated region
    $region42: #{tpu_custom_call.1} parent=1 // pred_check
      _
    $region43: #{tpu_custom_call.1} parent=1 // pred_check_branch
      %86 = sbr.rel (0) target = $region45
    $region44: #{tpu_custom_call.1} parent=1 // pred_region
      %88 = dma.done [#allocation8], 6144
    $region45: #{tpu_custom_call.1} parent=1 // pred_fallthru
      _
    // Predicated region
    $region46: #{tpu_custom_call.1} parent=1 // pred_check
      _
    $region47: #{tpu_custom_call.1} parent=1 // pred_check_branch
      %90 = sbr.rel (0) target = $region49
    $region48: #{tpu_custom_call.1} parent=1 // pred_region
      %92 = dma.done [#allocation8], 6144
    $region49: #{tpu_custom_call.1} parent=1 // pred_fallthru
      _
    // Predicated region
    $region50: #{tpu_custom_call.1} parent=1 // pred_check
      _
    $region51: #{tpu_custom_call.1} parent=1 // pred_check_branch
      %94 = sbr.rel (0) target = $region53
    $region52: #{tpu_custom_call.1} parent=1 // pred_region
      %96 = dma.done [#allocation11], 2048
    $region53: #{tpu_custom_call.1} parent=1 // pred_fallthru
      _
    %p97 = scmp.eq.s32.totalorder 0, 0
    // Predicated region
    $region54: #{tpu_custom_call.1} parent=1 // pred_check
      %p98 = pneg %p97
    $region55: #{tpu_custom_call.1} parent=1 // pred_check_branch
      %100 = sbr.rel (%p98) target = $region57
    $region56: #{tpu_custom_call.1} parent=1 // pred_region
      %101 = vst [vmem:[#allocation3] sm:$0xff] 0.0
    $region57: #{tpu_custom_call.1} parent=1 // pred_fallthru
      _
    %v102 = vld [vmem:[#allocation9] sm:$0xff]
    %v103 = vld [vmem:[#allocation9 + $0x8] sm:$0xff]
    %v104 = vld [vmem:[#allocation9 + $0x10] sm:$0xff]
    %v105 = vld [vmem:[#allocation9 + $0x18] sm:$0xff]
    %v106 = vld [vmem:[#allocation9 + $0x20] sm:$0xff]
    %v107 = vld [vmem:[#allocation9 + $0x28] sm:$0xff]
    %v108 = vld [vmem:[#allocation9 + $0x30] sm:$0xff]
    %v109 = vld [vmem:[#allocation9 + $0x38] sm:$0xff]
    %v110 = vld [vmem:[#allocation9 + $0x40] sm:$0xff]
    %v111 = vld [vmem:[#allocation9 + $0x48] sm:$0xff]
    %v112 = vld [vmem:[#allocation9 + $0x50] sm:$0xff]
    %v113 = vld [vmem:[#allocation9 + $0x58] sm:$0xff]
    %v114 = vld [vmem:[#allocation9 + $0x60] sm:$0xff]
    %v115 = vld [vmem:[#allocation9 + $0x68] sm:$0xff]
    %v116 = vld [vmem:[#allocation9 + $0x70] sm:$0xff]
    %v117 = vld [vmem:[#allocation9 + $0x78] sm:$0xff]
    %v118 = vld [vmem:[#allocation9 + $0x80] sm:$0xff]
    %v119 = vld [vmem:[#allocation9 + $0x88] sm:$0xff]
    %v120 = vld [vmem:[#allocation9 + $0x90] sm:$0xff]
    %v121 = vld [vmem:[#allocation9 + $0x98] sm:$0xff]
    %v122 = vld [vmem:[#allocation9 + $0xa0] sm:$0xff]
    %v123 = vld [vmem:[#allocation9 + $0xa8] sm:$0xff]
    %v124 = vld [vmem:[#allocation9 + $0xb0] sm:$0xff]
    %v125 = vld [vmem:[#allocation9 + $0xb8] sm:$0xff]
    %v126 = vld [vmem:[#allocation9 + $0xc0] sm:$0xff]
    %v127 = vld [vmem:[#allocation9 + $0xc8] sm:$0xff]
    %v128 = vld [vmem:[#allocation9 + $0xd0] sm:$0xff]
    %v129 = vld [vmem:[#allocation9 + $0xd8] sm:$0xff]
    %v130 = vld [vmem:[#allocation9 + $0xe0] sm:$0xff]
    %v131 = vld [vmem:[#allocation9 + $0xe8] sm:$0xff]
    %v132 = vld [vmem:[#allocation9 + $0xf0] sm:$0xff]
    %v133 = vld [vmem:[#allocation9 + $0xf8] sm:$0xff]
    %v134 = vld [vmem:[#allocation9 + $0x100] sm:$0xff]
    %v135 = vld [vmem:[#allocation9 + $0x108] sm:$0xff]
    %v136 = vld [vmem:[#allocation9 + $0x110] sm:$0xff]
    %v137 = vld [vmem:[#allocation9 + $0x118] sm:$0xff]
    %v138 = vld [vmem:[#allocation9 + $0x120] sm:$0xff]
    %v139 = vld [vmem:[#allocation9 + $0x128] sm:$0xff]
    %v140 = vld [vmem:[#allocation9 + $0x130] sm:$0xff]
    %v141 = vld [vmem:[#allocation9 + $0x138] sm:$0xff]
    %v142 = vld [vmem:[#allocation9 + $0x140] sm:$0xff]
    %v143 = vld [vmem:[#allocation9 + $0x148] sm:$0xff]
    %v144 = vld [vmem:[#allocation9 + $0x150] sm:$0xff]
    %v145 = vld [vmem:[#allocation9 + $0x158] sm:$0xff]
    %v146 = vld [vmem:[#allocation9 + $0x160] sm:$0xff]
    %v147 = vld [vmem:[#allocation9 + $0x168] sm:$0xff]
    %v148 = vld [vmem:[#allocation9 + $0x170] sm:$0xff]
    %v149 = vld [vmem:[#allocation9 + $0x178] sm:$0xff]
    %v150 = vld [vmem:[%s4] sm:$0x1]
    %v152 = vperm.slane %v150, 0
    %v154 = vld [vmem:[#allocation5] sm:$0xff]
    %v155 = vld [vmem:[#allocation5 + $0x8] sm:$0xff]
    %v156 = vld [vmem:[#allocation5 + $0x10] sm:$0xff]
    %v157 = vld [vmem:[#allocation5 + $0x18] sm:$0xff]
    %v158 = vld [vmem:[#allocation5 + $0x20] sm:$0xff]
    %v159 = vld [vmem:[#allocation5 + $0x28] sm:$0xff]
    %v160 = vld [vmem:[#allocation5 + $0x30] sm:$0xff]
    %v161 = vld [vmem:[#allocation5 + $0x38] sm:$0xff]
    %v162 = vld [vmem:[#allocation7] sm:$0xff]
    %v163 = vld [vmem:[#allocation7 + $0x8] sm:$0xff]
    %v164 = vld [vmem:[#allocation7 + $0x10] sm:$0xff]
    %v165 = vld [vmem:[#allocation7 + $0x18] sm:$0xff]
    %v166 = vld [vmem:[#allocation7 + $0x20] sm:$0xff]
    %v167 = vld [vmem:[#allocation7 + $0x28] sm:$0xff]
    %v168 = vld [vmem:[#allocation7 + $0x30] sm:$0xff]
    %v169 = vld [vmem:[#allocation7 + $0x38] sm:$0xff]
    %v170 = vld [vmem:[#allocation7 + $0x40] sm:$0xff]
    %v171 = vld [vmem:[#allocation7 + $0x48] sm:$0xff]
    %v172 = vld [vmem:[#allocation7 + $0x50] sm:$0xff]
    %v173 = vld [vmem:[#allocation7 + $0x58] sm:$0xff]
    %v174 = vld [vmem:[#allocation7 + $0x60] sm:$0xff]
    %v175 = vld [vmem:[#allocation7 + $0x68] sm:$0xff]
    %v176 = vld [vmem:[#allocation7 + $0x70] sm:$0xff]
    %v177 = vld [vmem:[#allocation7 + $0x78] sm:$0xff]
    %v178 = vld [vmem:[#allocation7 + $0x80] sm:$0xff]
    %v179 = vld [vmem:[#allocation7 + $0x88] sm:$0xff]
    %v180 = vld [vmem:[#allocation7 + $0x90] sm:$0xff]
    %v181 = vld [vmem:[#allocation7 + $0x98] sm:$0xff]
    %v182 = vld [vmem:[#allocation7 + $0xa0] sm:$0xff]
    %v183 = vld [vmem:[#allocation7 + $0xa8] sm:$0xff]
    %v184 = vld [vmem:[#allocation7 + $0xb0] sm:$0xff]
    %v185 = vld [vmem:[#allocation7 + $0xb8] sm:$0xff]
    %v186 = vld [vmem:[#allocation7 + $0xc0] sm:$0xff]
    %v187 = vld [vmem:[#allocation7 + $0xc8] sm:$0xff]
    %v188 = vld [vmem:[#allocation7 + $0xd0] sm:$0xff]
    %v189 = vld [vmem:[#allocation7 + $0xd8] sm:$0xff]
    %v190 = vld [vmem:[#allocation7 + $0xe0] sm:$0xff]
    %v191 = vld [vmem:[#allocation7 + $0xe8] sm:$0xff]
    %v192 = vld [vmem:[#allocation7 + $0xf0] sm:$0xff]
    %v193 = vld [vmem:[#allocation7 + $0xf8] sm:$0xff]
    %v194 = vld [vmem:[#allocation7 + $0x100] sm:$0xff]
    %v195 = vld [vmem:[#allocation7 + $0x108] sm:$0xff]
    %v196 = vld [vmem:[#allocation7 + $0x110] sm:$0xff]
    %v197 = vld [vmem:[#allocation7 + $0x118] sm:$0xff]
    %v198 = vld [vmem:[#allocation7 + $0x120] sm:$0xff]
    %v199 = vld [vmem:[#allocation7 + $0x128] sm:$0xff]
    %v200 = vld [vmem:[#allocation7 + $0x130] sm:$0xff]
    %v201 = vld [vmem:[#allocation7 + $0x138] sm:$0xff]
    %v202 = vld [vmem:[#allocation7 + $0x140] sm:$0xff]
    %v203 = vld [vmem:[#allocation7 + $0x148] sm:$0xff]
    %v204 = vld [vmem:[#allocation7 + $0x150] sm:$0xff]
    %v205 = vld [vmem:[#allocation7 + $0x158] sm:$0xff]
    %v206 = vld [vmem:[#allocation7 + $0x160] sm:$0xff]
    %v207 = vld [vmem:[#allocation7 + $0x168] sm:$0xff]
    %v208 = vld [vmem:[#allocation7 + $0x170] sm:$0xff]
    %v209 = vld [vmem:[#allocation7 + $0x178] sm:$0xff]
    %v210 = vld [vmem:[%s3] sm:$0x7]
    %v212 = vperm.slane %v210, 0
    %v213 = vperm.slane %v210, 1
    %v214 = vperm.slane %v210, 2
    %218 = vmatpush.msra.mxu0 %v207
    %219 = vmatpush.msra.mxu0 %v204
    %220 = vmatpush.msra.mxu0 %v201
    %221 = vmatpush.msra.mxu0 %v198
    %222 = vmatpush.msra.mxu0 %v195
    %223 = vmatpush.msra.mxu0 %v192
    %224 = vmatpush.msra.mxu0 %v189
    %225 = vmatpush.msra.mxu0 %v186
    %226 = vmatpush.msra.mxu0 %v183
    %227 = vmatpush.msra.mxu0 %v180
    %228 = vmatpush.msra.mxu0 %v177
    %229 = vmatpush.msra.mxu0 %v174
    %230 = vmatpush.msra.mxu0 %v171
    %231 = vmatpush.msra.mxu0 %v168
    %232 = vmatpush.msra.mxu0 %v165
    %233 = vmatpush.msra.mxu0 %v162
    %234 = vmatmul.f32.gmra.mxu0 %v154
    %v235 = vpop.f32.mrf.mxu0
    %v236 = vadd.f32 %v212, %v235
    %237 = vmatmul.f32.gmra.mxu0 %v155
    %v238 = vpop.f32.mrf.mxu0
    %v239 = vadd.f32 %v212, %v238
    %240 = vmatmul.f32.gmra.mxu0 %v156
    %v241 = vpop.f32.mrf.mxu0
    %v242 = vadd.f32 %v212, %v241
    %243 = vmatmul.f32.gmra.mxu0 %v157
    %v244 = vpop.f32.mrf.mxu0
    %v245 = vadd.f32 %v212, %v244
    %246 = vmatmul.f32.gmra.mxu0 %v158
    %v247 = vpop.f32.mrf.mxu0
    %v248 = vadd.f32 %v212, %v247
    %249 = vmatmul.f32.gmra.mxu0 %v159
    %v250 = vpop.f32.mrf.mxu0
    %v251 = vadd.f32 %v212, %v250
    %252 = vmatmul.f32.gmra.mxu0 %v160
    %v253 = vpop.f32.mrf.mxu0
    %v254 = vadd.f32 %v212, %v253
    %255 = vmatmul.f32.gmra.mxu0 %v161
    %v256 = vpop.f32.mrf.mxu0
    %v257 = vadd.f32 %v212, %v256
    %258 = vdwg.mxu0
    %259 = vmatpush.msra.mxu0 %v208
    %260 = vmatpush.msra.mxu0 %v205
    %261 = vmatpush.msra.mxu0 %v202
    %262 = vmatpush.msra.mxu0 %v199
    %263 = vmatpush.msra.mxu0 %v196
    %264 = vmatpush.msra.mxu0 %v193
    %265 = vmatpush.msra.mxu0 %v190
    %266 = vmatpush.msra.mxu0 %v187
    %267 = vmatpush.msra.mxu0 %v184
    %268 = vmatpush.msra.mxu0 %v181
    %269 = vmatpush.msra.mxu0 %v178
    %270 = vmatpush.msra.mxu0 %v175
    %271 = vmatpush.msra.mxu0 %v172
    %272 = vmatpush.msra.mxu0 %v169
    %273 = vmatpush.msra.mxu0 %v166
    %274 = vmatpush.msra.mxu0 %v163
    %275 = vmatmul.f32.gmra.mxu0 %v154
    %v276 = vpop.f32.mrf.mxu0
    %v277 = vadd.f32 %v213, %v276
    %278 = vmatmul.f32.gmra.mxu0 %v155
    %v279 = vpop.f32.mrf.mxu0
    %v280 = vadd.f32 %v213, %v279
    %281 = vmatmul.f32.gmra.mxu0 %v156
    %v282 = vpop.f32.mrf.mxu0
    %v283 = vadd.f32 %v213, %v282
    %284 = vmatmul.f32.gmra.mxu0 %v157
    %v285 = vpop.f32.mrf.mxu0
    %v286 = vadd.f32 %v213, %v285
    %287 = vmatmul.f32.gmra.mxu0 %v158
    %v288 = vpop.f32.mrf.mxu0
    %v289 = vadd.f32 %v213, %v288
    %290 = vmatmul.f32.gmra.mxu0 %v159
    %v291 = vpop.f32.mrf.mxu0
    %v292 = vadd.f32 %v213, %v291
    %293 = vmatmul.f32.gmra.mxu0 %v160
    %v294 = vpop.f32.mrf.mxu0
    %v295 = vadd.f32 %v213, %v294
    %296 = vmatmul.f32.gmra.mxu0 %v161
    %v297 = vpop.f32.mrf.mxu0
    %v298 = vadd.f32 %v213, %v297
    %299 = vdwg.mxu0
    %300 = vmatpush.msra.mxu0 %v209
    %301 = vmatpush.msra.mxu0 %v206
    %302 = vmatpush.msra.mxu0 %v203
    %303 = vmatpush.msra.mxu0 %v200
    %304 = vmatpush.msra.mxu0 %v197
    %305 = vmatpush.msra.mxu0 %v194
    %306 = vmatpush.msra.mxu0 %v191
    %307 = vmatpush.msra.mxu0 %v188
    %308 = vmatpush.msra.mxu0 %v185
    %309 = vmatpush.msra.mxu0 %v182
    %310 = vmatpush.msra.mxu0 %v179
    %311 = vmatpush.msra.mxu0 %v176
    %312 = vmatpush.msra.mxu0 %v173
    %313 = vmatpush.msra.mxu0 %v170
    %314 = vmatpush.msra.mxu0 %v167
    %315 = vmatpush.msra.mxu0 %v164
    %316 = vmatmul.f32.gmra.mxu0 %v154
    %v317 = vpop.f32.mrf.mxu0
    %v318 = vadd.f32 %v214, %v317
    %319 = vmatmul.f32.gmra.mxu0 %v155
    %v320 = vpop.f32.mrf.mxu0
    %v321 = vadd.f32 %v214, %v320
    %322 = vmatmul.f32.gmra.mxu0 %v156
    %v323 = vpop.f32.mrf.mxu0
    %v324 = vadd.f32 %v214, %v323
    %325 = vmatmul.f32.gmra.mxu0 %v157
    %v326 = vpop.f32.mrf.mxu0
    %v327 = vadd.f32 %v214, %v326
    %328 = vmatmul.f32.gmra.mxu0 %v158
    %v329 = vpop.f32.mrf.mxu0
    %v330 = vadd.f32 %v214, %v329
    %331 = vmatmul.f32.gmra.mxu0 %v159
    %v332 = vpop.f32.mrf.mxu0
    %v333 = vadd.f32 %v214, %v332
    %334 = vmatmul.f32.gmra.mxu0 %v160
    %v335 = vpop.f32.mrf.mxu0
    %v336 = vadd.f32 %v214, %v335
    %337 = vmatmul.f32.gmra.mxu0 %v161
    %v338 = vpop.f32.mrf.mxu0
    %v339 = vadd.f32 %v214, %v338
    %340 = vdwg.mxu0
    %341 = vst [vmem:[#allocation2] sm:$0xff] %v236
    %342 = vst [vmem:[#allocation2 + $0x8] sm:$0xff] %v277
    %343 = vst [vmem:[#allocation2 + $0x10] sm:$0xff] %v318
    %344 = vst [vmem:[#allocation2 + $0x18] sm:$0xff] %v239
    %345 = vst [vmem:[#allocation2 + $0x20] sm:$0xff] %v280
    %346 = vst [vmem:[#allocation2 + $0x28] sm:$0xff] %v321
    %347 = vst [vmem:[#allocation2 + $0x30] sm:$0xff] %v242
    %348 = vst [vmem:[#allocation2 + $0x38] sm:$0xff] %v283
    %349 = vst [vmem:[#allocation2 + $0x40] sm:$0xff] %v324
    %350 = vst [vmem:[#allocation2 + $0x48] sm:$0xff] %v245
    %351 = vst [vmem:[#allocation2 + $0x50] sm:$0xff] %v286
    %352 = vst [vmem:[#allocation2 + $0x58] sm:$0xff] %v327
    %353 = vst [vmem:[#allocation2 + $0x60] sm:$0xff] %v248
    %354 = vst [vmem:[#allocation2 + $0x68] sm:$0xff] %v289
    %355 = vst [vmem:[#allocation2 + $0x70] sm:$0xff] %v330
    %356 = vst [vmem:[#allocation2 + $0x78] sm:$0xff] %v251
    %357 = vst [vmem:[#allocation2 + $0x80] sm:$0xff] %v292
    %358 = vst [vmem:[#allocation2 + $0x88] sm:$0xff] %v333
    %359 = vst [vmem:[#allocation2 + $0x90] sm:$0xff] %v254
    %360 = vst [vmem:[#allocation2 + $0x98] sm:$0xff] %v295
    %361 = vst [vmem:[#allocation2 + $0xa0] sm:$0xff] %v336
    %362 = vst [vmem:[#allocation2 + $0xa8] sm:$0xff] %v257
    %363 = vst [vmem:[#allocation2 + $0xb0] sm:$0xff] %v298
    %364 = vst [vmem:[#allocation2 + $0xb8] sm:$0xff] %v339
    %v365 = vld [vmem:[#allocation3] sm:$0xff]
    %v366 = vld [vmem:[#allocation2] sm:$0xff]
    %v367 = vld [vmem:[#allocation2 + $0x8] sm:$0xff]
    %v368 = vld [vmem:[#allocation2 + $0x10] sm:$0xff]
    %369 = vmatpush.msra.mxu0 %v147
    %370 = vmatpush.msra.mxu0 %v144
    %371 = vmatpush.msra.mxu0 %v141
    %372 = vmatpush.msra.mxu0 %v138
    %373 = vmatpush.msra.mxu0 %v135
    %374 = vmatpush.msra.mxu0 %v132
    %375 = vmatpush.msra.mxu0 %v129
    %376 = vmatpush.msra.mxu0 %v126
    %377 = vmatpush.msra.mxu0 %v123
    %378 = vmatpush.msra.mxu0 %v120
    %379 = vmatpush.msra.mxu0 %v117
    %380 = vmatpush.msra.mxu0 %v114
    %381 = vmatpush.msra.mxu0 %v111
    %382 = vmatpush.msra.mxu0 %v108
    %383 = vmatpush.msra.mxu0 %v105
    %384 = vmatpush.msra.mxu0 %v102
    %385 = vmatmul.f32.gmra.mxu0 %v365
    %v386 = vpop.f32.mrf.mxu0
    %v387 = vadd.f32 0.0, %v386
    %388 = vdwg.mxu0
    %389 = vmatpush.msra.mxu0 %v148
    %390 = vmatpush.msra.mxu0 %v145
    %391 = vmatpush.msra.mxu0 %v142
    %392 = vmatpush.msra.mxu0 %v139
    %393 = vmatpush.msra.mxu0 %v136
    %394 = vmatpush.msra.mxu0 %v133
    %395 = vmatpush.msra.mxu0 %v130
    %396 = vmatpush.msra.mxu0 %v127
    %397 = vmatpush.msra.mxu0 %v124
    %398 = vmatpush.msra.mxu0 %v121
    %399 = vmatpush.msra.mxu0 %v118
    %400 = vmatpush.msra.mxu0 %v115
    %401 = vmatpush.msra.mxu0 %v112
    %402 = vmatpush.msra.mxu0 %v109
    %403 = vmatpush.msra.mxu0 %v106
    %404 = vmatpush.msra.mxu0 %v103
    %405 = vmatmul.f32.gmra.mxu0 %v365
    %v406 = vpop.f32.mrf.mxu0
    %v407 = vadd.f32 0.0, %v406
    %408 = vdwg.mxu0
    %409 = vmatpush.msra.mxu0 %v149
    %410 = vmatpush.msra.mxu0 %v146
    %411 = vmatpush.msra.mxu0 %v143
    %412 = vmatpush.msra.mxu0 %v140
    %413 = vmatpush.msra.mxu0 %v137
    %414 = vmatpush.msra.mxu0 %v134
    %415 = vmatpush.msra.mxu0 %v131
    %416 = vmatpush.msra.mxu0 %v128
    %417 = vmatpush.msra.mxu0 %v125
    %418 = vmatpush.msra.mxu0 %v122
    %419 = vmatpush.msra.mxu0 %v119
    %420 = vmatpush.msra.mxu0 %v116
    %421 = vmatpush.msra.mxu0 %v113
    %422 = vmatpush.msra.mxu0 %v110
    %423 = vmatpush.msra.mxu0 %v107
    %424 = vmatpush.msra.mxu0 %v104
    %425 = vmatmul.f32.gmra.mxu0 %v365
    %v426 = vpop.f32.mrf.mxu0
    %v427 = vadd.f32 0.0, %v426
    %428 = vdwg.mxu0
    %v429 = vadd.f32 %v366, %v387
    %v430 = vadd.f32 %v367, %v407
    %v431 = vxor.u32 %v429, 2147483648
    %v432 = vxor.u32 %v430, 2147483648
    %v433 = vmul.f32 %v431, 1.442695
    %v434 = vpow.pop %v433
    %v435 = vmul.f32 %v432, 1.442695
    %v436 = vpow.pop %v435
    %v437 = vadd.f32 %v434, 1.0
    %v438 = vadd.f32 %v436, 1.0
    %v439 = vrcp.pop %v437
    %v440 = vmul.f32 %v437, %v439
    %v441 = vsub.f32 1.0, %v440
    %v442 = vmul.f32 %v439, %v441
    %v443 = vadd.f32 %v439, %v442
    %vm444 = vweird.f32 %v437
    %vm445 = vweird.f32 %v439
    %vm446 = vmor %vm444, %vm445
    %v447 = vsel %vm446, %v439, %v443
    %v448 = vand.u32 2147483647, %v437
    %vm449 = vcmp.eq.f32.partialorder %v448, 8.507059e+37
    %v450 = vand.u32 %v437, 2147483648
    %v451 = vor.u32 1.1754944e-38, %v450
    %v452 = vsel %vm449, %v451, %v447
    %v453 = vmul.f32 1.0, %v452
    %v454 = vrcp.pop %v438
    %v455 = vmul.f32 %v438, %v454
    %v456 = vsub.f32 1.0, %v455
    %v457 = vmul.f32 %v454, %v456
    %v458 = vadd.f32 %v454, %v457
    %vm459 = vweird.f32 %v438
    %vm460 = vweird.f32 %v454
    %vm461 = vmor %vm459, %vm460
    %v462 = vsel %vm461, %v454, %v458
    %v463 = vand.u32 2147483647, %v438
    %vm464 = vcmp.eq.f32.partialorder %v463, 8.507059e+37
    %v465 = vand.u32 %v438, 2147483648
    %v466 = vor.u32 1.1754944e-38, %v465
    %v467 = vsel %vm464, %v466, %v462
    %v468 = vmul.f32 1.0, %v467
    %v469 = vadd.f32 %v427, %v152
    %v470 = vmul.f32 %v453, %v469
    %v471 = vadd.f32 %v368, %v470
    %v472 = vtanh.pop %v471
    %v473 = vsub.f32 1.0, %v468
    %v474 = vmul.f32 %v473, %v472
    %v475 = vmul.f32 %v468, %v365
    %v476 = vadd.f32 %v474, %v475
    %v477 = vld [vmem:[#allocation2 + $0x18] sm:$0xff]
    %v478 = vld [vmem:[#allocation2 + $0x20] sm:$0xff]
    %v479 = vld [vmem:[#allocation2 + $0x28] sm:$0xff]
    %480 = vmatpush.msra.mxu0 %v147
    %481 = vmatpush.msra.mxu0 %v144
    %482 = vmatpush.msra.mxu0 %v141
    %483 = vmatpush.msra.mxu0 %v138
    %484 = vmatpush.msra.mxu0 %v135
    %485 = vmatpush.msra.mxu0 %v132
    %486 = vmatpush.msra.mxu0 %v129
    %487 = vmatpush.msra.mxu0 %v126
    %488 = vmatpush.msra.mxu0 %v123
    %489 = vmatpush.msra.mxu0 %v120
    %490 = vmatpush.msra.mxu0 %v117
    %491 = vmatpush.msra.mxu0 %v114
    %492 = vmatpush.msra.mxu0 %v111
    %493 = vmatpush.msra.mxu0 %v108
    %494 = vmatpush.msra.mxu0 %v105
    %495 = vmatpush.msra.mxu0 %v102
    %496 = vmatmul.f32.gmra.mxu0 %v476
    %v497 = vpop.f32.mrf.mxu0
    %v498 = vadd.f32 0.0, %v497
    %499 = vdwg.mxu0
    %500 = vmatpush.msra.mxu0 %v148
    %501 = vmatpush.msra.mxu0 %v145
    %502 = vmatpush.msra.mxu0 %v142
    %503 = vmatpush.msra.mxu0 %v139
    %504 = vmatpush.msra.mxu0 %v136
    %505 = vmatpush.msra.mxu0 %v133
    %506 = vmatpush.msra.mxu0 %v130
    %507 = vmatpush.msra.mxu0 %v127
    %508 = vmatpush.msra.mxu0 %v124
    %509 = vmatpush.msra.mxu0 %v121
    %510 = vmatpush.msra.mxu0 %v118
    %511 = vmatpush.msra.mxu0 %v115
    %512 = vmatpush.msra.mxu0 %v112
    %513 = vmatpush.msra.mxu0 %v109
    %514 = vmatpush.msra.mxu0 %v106
    %515 = vmatpush.msra.mxu0 %v103
    %516 = vmatmul.f32.gmra.mxu0 %v476
    %v517 = vpop.f32.mrf.mxu0
    %v518 = vadd.f32 0.0, %v517
    %519 = vdwg.mxu0
    %520 = vmatpush.msra.mxu0 %v149
    %521 = vmatpush.msra.mxu0 %v146
    %522 = vmatpush.msra.mxu0 %v143
    %523 = vmatpush.msra.mxu0 %v140
    %524 = vmatpush.msra.mxu0 %v137
    %525 = vmatpush.msra.mxu0 %v134
    %526 = vmatpush.msra.mxu0 %v131
    %527 = vmatpush.msra.mxu0 %v128
    %528 = vmatpush.msra.mxu0 %v125
    %529 = vmatpush.msra.mxu0 %v122
    %530 = vmatpush.msra.mxu0 %v119
    %531 = vmatpush.msra.mxu0 %v116
    %532 = vmatpush.msra.mxu0 %v113
    %533 = vmatpush.msra.mxu0 %v110
    %534 = vmatpush.msra.mxu0 %v107
    %535 = vmatpush.msra.mxu0 %v104
    %536 = vmatmul.f32.gmra.mxu0 %v476
    %v537 = vpop.f32.mrf.mxu0
    %v538 = vadd.f32 0.0, %v537
    %539 = vdwg.mxu0
    %v540 = vadd.f32 %v477, %v498
    %v541 = vadd.f32 %v478, %v518
    %v542 = vxor.u32 %v540, 2147483648
    %v543 = vxor.u32 %v541, 2147483648
    %v544 = vmul.f32 %v542, 1.442695
    %v545 = vpow.pop %v544
    %v546 = vmul.f32 %v543, 1.442695
    %v547 = vpow.pop %v546
    %v548 = vadd.f32 %v545, 1.0
    %v549 = vadd.f32 %v547, 1.0
    %v550 = vrcp.pop %v548
    %v551 = vmul.f32 %v548, %v550
    %v552 = vsub.f32 1.0, %v551
    %v553 = vmul.f32 %v550, %v552
    %v554 = vadd.f32 %v550, %v553
    %vm555 = vweird.f32 %v548
    %vm556 = vweird.f32 %v550
    %vm557 = vmor %vm555, %vm556
    %v558 = vsel %vm557, %v550, %v554
    %v559 = vand.u32 2147483647, %v548
    %vm560 = vcmp.eq.f32.partialorder %v559, 8.507059e+37
    %v561 = vand.u32 %v548, 2147483648
    %v562 = vor.u32 1.1754944e-38, %v561
    %v563 = vsel %vm560, %v562, %v558
    %v564 = vmul.f32 1.0, %v563
    %v565 = vrcp.pop %v549
    %v566 = vmul.f32 %v549, %v565
    %v567 = vsub.f32 1.0, %v566
    %v568 = vmul.f32 %v565, %v567
    %v569 = vadd.f32 %v565, %v568
    %vm570 = vweird.f32 %v549
    %vm571 = vweird.f32 %v565
    %vm572 = vmor %vm570, %vm571
    %v573 = vsel %vm572, %v565, %v569
    %v574 = vand.u32 2147483647, %v549
    %vm575 = vcmp.eq.f32.partialorder %v574, 8.507059e+37
    %v576 = vand.u32 %v549, 2147483648
    %v577 = vor.u32 1.1754944e-38, %v576
    %v578 = vsel %vm575, %v577, %v573
    %v579 = vmul.f32 1.0, %v578
    %v580 = vadd.f32 %v538, %v152
    %v581 = vmul.f32 %v564, %v580
    %v582 = vadd.f32 %v479, %v581
    %v583 = vtanh.pop %v582
    %v584 = vsub.f32 1.0, %v579
    %v585 = vmul.f32 %v584, %v583
    %v586 = vmul.f32 %v579, %v476
    %v587 = vadd.f32 %v585, %v586
    %v588 = vld [vmem:[#allocation2 + $0x30] sm:$0xff]
    %v589 = vld [vmem:[#allocation2 + $0x38] sm:$0xff]
    %v590 = vld [vmem:[#allocation2 + $0x40] sm:$0xff]
    %591 = vmatpush.msra.mxu0 %v147
    %592 = vmatpush.msra.mxu0 %v144
    %593 = vmatpush.msra.mxu0 %v141
    %594 = vmatpush.msra.mxu0 %v138
    %595 = vmatpush.msra.mxu0 %v135
    %596 = vmatpush.msra.mxu0 %v132
    %597 = vmatpush.msra.mxu0 %v129
    %598 = vmatpush.msra.mxu0 %v126
    %599 = vmatpush.msra.mxu0 %v123
    %600 = vmatpush.msra.mxu0 %v120
    %601 = vmatpush.msra.mxu0 %v117
    %602 = vmatpush.msra.mxu0 %v114
    %603 = vmatpush.msra.mxu0 %v111
    %604 = vmatpush.msra.mxu0 %v108
    %605 = vmatpush.msra.mxu0 %v105
    %606 = vmatpush.msra.mxu0 %v102
    %607 = vmatmul.f32.gmra.mxu0 %v587
    %v608 = vpop.f32.mrf.mxu0
    %v609 = vadd.f32 0.0, %v608
    %610 = vdwg.mxu0
    %611 = vmatpush.msra.mxu0 %v148
    %612 = vmatpush.msra.mxu0 %v145
    %613 = vmatpush.msra.mxu0 %v142
    %614 = vmatpush.msra.mxu0 %v139
    %615 = vmatpush.msra.mxu0 %v136
    %616 = vmatpush.msra.mxu0 %v133
    %617 = vmatpush.msra.mxu0 %v130
    %618 = vmatpush.msra.mxu0 %v127
    %619 = vmatpush.msra.mxu0 %v124
    %620 = vmatpush.msra.mxu0 %v121
    %621 = vmatpush.msra.mxu0 %v118
    %622 = vmatpush.msra.mxu0 %v115
    %623 = vmatpush.msra.mxu0 %v112
    %624 = vmatpush.msra.mxu0 %v109
    %625 = vmatpush.msra.mxu0 %v106
    %626 = vmatpush.msra.mxu0 %v103
    %627 = vmatmul.f32.gmra.mxu0 %v587
    %v628 = vpop.f32.mrf.mxu0
    %v629 = vadd.f32 0.0, %v628
    %630 = vdwg.mxu0
    %631 = vmatpush.msra.mxu0 %v149
    %632 = vmatpush.msra.mxu0 %v146
    %633 = vmatpush.msra.mxu0 %v143
    %634 = vmatpush.msra.mxu0 %v140
    %635 = vmatpush.msra.mxu0 %v137
    %636 = vmatpush.msra.mxu0 %v134
    %637 = vmatpush.msra.mxu0 %v131
    %638 = vmatpush.msra.mxu0 %v128
    %639 = vmatpush.msra.mxu0 %v125
    %640 = vmatpush.msra.mxu0 %v122
    %641 = vmatpush.msra.mxu0 %v119
    %642 = vmatpush.msra.mxu0 %v116
    %643 = vmatpush.msra.mxu0 %v113
    %644 = vmatpush.msra.mxu0 %v110
    %645 = vmatpush.msra.mxu0 %v107
    %646 = vmatpush.msra.mxu0 %v104
    %647 = vmatmul.f32.gmra.mxu0 %v587
    %v648 = vpop.f32.mrf.mxu0
    %v649 = vadd.f32 0.0, %v648
    %650 = vdwg.mxu0
    %v651 = vadd.f32 %v588, %v609
    %v652 = vadd.f32 %v589, %v629
    %v653 = vxor.u32 %v651, 2147483648
    %v654 = vxor.u32 %v652, 2147483648
    %v655 = vmul.f32 %v653, 1.442695
    %v656 = vpow.pop %v655
    %v657 = vmul.f32 %v654, 1.442695
    %v658 = vpow.pop %v657
    %v659 = vadd.f32 %v656, 1.0
    %v660 = vadd.f32 %v658, 1.0
    %v661 = vrcp.pop %v659
    %v662 = vmul.f32 %v659, %v661
    %v663 = vsub.f32 1.0, %v662
    %v664 = vmul.f32 %v661, %v663
    %v665 = vadd.f32 %v661, %v664
    %vm666 = vweird.f32 %v659
    %vm667 = vweird.f32 %v661
    %vm668 = vmor %vm666, %vm667
    %v669 = vsel %vm668, %v661, %v665
    %v670 = vand.u32 2147483647, %v659
    %vm671 = vcmp.eq.f32.partialorder %v670, 8.507059e+37
    %v672 = vand.u32 %v659, 2147483648
    %v673 = vor.u32 1.1754944e-38, %v672
    %v674 = vsel %vm671, %v673, %v669
    %v675 = vmul.f32 1.0, %v674
    %v676 = vrcp.pop %v660
    %v677 = vmul.f32 %v660, %v676
    %v678 = vsub.f32 1.0, %v677
    %v679 = vmul.f32 %v676, %v678
    %v680 = vadd.f32 %v676, %v679
    %vm681 = vweird.f32 %v660
    %vm682 = vweird.f32 %v676
    %vm683 = vmor %vm681, %vm682
    %v684 = vsel %vm683, %v676, %v680
    %v685 = vand.u32 2147483647, %v660
    %vm686 = vcmp.eq.f32.partialorder %v685, 8.507059e+37
    %v687 = vand.u32 %v660, 2147483648
    %v688 = vor.u32 1.1754944e-38, %v687
    %v689 = vsel %vm686, %v688, %v684
    %v690 = vmul.f32 1.0, %v689
    %v691 = vadd.f32 %v649, %v152
    %v692 = vmul.f32 %v675, %v691
    %v693 = vadd.f32 %v590, %v692
    %v694 = vtanh.pop %v693
    %v695 = vsub.f32 1.0, %v690
    %v696 = vmul.f32 %v695, %v694
    %v697 = vmul.f32 %v690, %v587
    %v698 = vadd.f32 %v696, %v697
    %v699 = vld [vmem:[#allocation2 + $0x48] sm:$0xff]
    %v700 = vld [vmem:[#allocation2 + $0x50] sm:$0xff]
    %v701 = vld [vmem:[#allocation2 + $0x58] sm:$0xff]
    %702 = vmatpush.msra.mxu0 %v147
    %703 = vmatpush.msra.mxu0 %v144
    %704 = vmatpush.msra.mxu0 %v141
    %705 = vmatpush.msra.mxu0 %v138
    %706 = vmatpush.msra.mxu0 %v135
    %707 = vmatpush.msra.mxu0 %v132
    %708 = vmatpush.msra.mxu0 %v129
    %709 = vmatpush.msra.mxu0 %v126
    %710 = vmatpush.msra.mxu0 %v123
    %711 = vmatpush.msra.mxu0 %v120
    %712 = vmatpush.msra.mxu0 %v117
    %713 = vmatpush.msra.mxu0 %v114
    %714 = vmatpush.msra.mxu0 %v111
    %715 = vmatpush.msra.mxu0 %v108
    %716 = vmatpush.msra.mxu0 %v105
    %717 = vmatpush.msra.mxu0 %v102
    %718 = vmatmul.f32.gmra.mxu0 %v698
    %v719 = vpop.f32.mrf.mxu0
    %v720 = vadd.f32 0.0, %v719
    %721 = vdwg.mxu0
    %722 = vmatpush.msra.mxu0 %v148
    %723 = vmatpush.msra.mxu0 %v145
    %724 = vmatpush.msra.mxu0 %v142
    %725 = vmatpush.msra.mxu0 %v139
    %726 = vmatpush.msra.mxu0 %v136
    %727 = vmatpush.msra.mxu0 %v133
    %728 = vmatpush.msra.mxu0 %v130
    %729 = vmatpush.msra.mxu0 %v127
    %730 = vmatpush.msra.mxu0 %v124
    %731 = vmatpush.msra.mxu0 %v121
    %732 = vmatpush.msra.mxu0 %v118
    %733 = vmatpush.msra.mxu0 %v115
    %734 = vmatpush.msra.mxu0 %v112
    %735 = vmatpush.msra.mxu0 %v109
    %736 = vmatpush.msra.mxu0 %v106
    %737 = vmatpush.msra.mxu0 %v103
    %738 = vmatmul.f32.gmra.mxu0 %v698
    %v739 = vpop.f32.mrf.mxu0
    %v740 = vadd.f32 0.0, %v739
    %741 = vdwg.mxu0
    %742 = vmatpush.msra.mxu0 %v149
    %743 = vmatpush.msra.mxu0 %v146
    %744 = vmatpush.msra.mxu0 %v143
    %745 = vmatpush.msra.mxu0 %v140
    %746 = vmatpush.msra.mxu0 %v137
    %747 = vmatpush.msra.mxu0 %v134
    %748 = vmatpush.msra.mxu0 %v131
    %749 = vmatpush.msra.mxu0 %v128
    %750 = vmatpush.msra.mxu0 %v125
    %751 = vmatpush.msra.mxu0 %v122
    %752 = vmatpush.msra.mxu0 %v119
    %753 = vmatpush.msra.mxu0 %v116
    %754 = vmatpush.msra.mxu0 %v113
    %755 = vmatpush.msra.mxu0 %v110
    %756 = vmatpush.msra.mxu0 %v107
    %757 = vmatpush.msra.mxu0 %v104
    %758 = vmatmul.f32.gmra.mxu0 %v698
    %v759 = vpop.f32.mrf.mxu0
    %v760 = vadd.f32 0.0, %v759
    %761 = vdwg.mxu0
    %v762 = vadd.f32 %v699, %v720
    %v763 = vadd.f32 %v700, %v740
    %v764 = vxor.u32 %v762, 2147483648
    %v765 = vxor.u32 %v763, 2147483648
    %v766 = vmul.f32 %v764, 1.442695
    %v767 = vpow.pop %v766
    %v768 = vmul.f32 %v765, 1.442695
    %v769 = vpow.pop %v768
    %v770 = vadd.f32 %v767, 1.0
    %v771 = vadd.f32 %v769, 1.0
    %v772 = vrcp.pop %v770
    %v773 = vmul.f32 %v770, %v772
    %v774 = vsub.f32 1.0, %v773
    %v775 = vmul.f32 %v772, %v774
    %v776 = vadd.f32 %v772, %v775
    %vm777 = vweird.f32 %v770
    %vm778 = vweird.f32 %v772
    %vm779 = vmor %vm777, %vm778
    %v780 = vsel %vm779, %v772, %v776
    %v781 = vand.u32 2147483647, %v770
    %vm782 = vcmp.eq.f32.partialorder %v781, 8.507059e+37
    %v783 = vand.u32 %v770, 2147483648
    %v784 = vor.u32 1.1754944e-38, %v783
    %v785 = vsel %vm782, %v784, %v780
    %v786 = vmul.f32 1.0, %v785
    %v787 = vrcp.pop %v771
    %v788 = vmul.f32 %v771, %v787
    %v789 = vsub.f32 1.0, %v788
    %v790 = vmul.f32 %v787, %v789
    %v791 = vadd.f32 %v787, %v790
    %vm792 = vweird.f32 %v771
    %vm793 = vweird.f32 %v787
    %vm794 = vmor %vm792, %vm793
    %v795 = vsel %vm794, %v787, %v791
    %v796 = vand.u32 2147483647, %v771
    %vm797 = vcmp.eq.f32.partialorder %v796, 8.507059e+37
    %v798 = vand.u32 %v771, 2147483648
    %v799 = vor.u32 1.1754944e-38, %v798
    %v800 = vsel %vm797, %v799, %v795
    %v801 = vmul.f32 1.0, %v800
    %v802 = vadd.f32 %v760, %v152
    %v803 = vmul.f32 %v786, %v802
    %v804 = vadd.f32 %v701, %v803
    %v805 = vtanh.pop %v804
    %v806 = vsub.f32 1.0, %v801
    %v807 = vmul.f32 %v806, %v805
    %v808 = vmul.f32 %v801, %v698
    %v809 = vadd.f32 %v807, %v808
    %v810 = vld [vmem:[#allocation2 + $0x60] sm:$0xff]
    %v811 = vld [vmem:[#allocation2 + $0x68] sm:$0xff]
    %v812 = vld [vmem:[#allocation2 + $0x70] sm:$0xff]
    %813 = vmatpush.msra.mxu0 %v147
    %814 = vmatpush.msra.mxu0 %v144
    %815 = vmatpush.msra.mxu0 %v141
    %816 = vmatpush.msra.mxu0 %v138
    %817 = vmatpush.msra.mxu0 %v135
    %818 = vmatpush.msra.mxu0 %v132
    %819 = vmatpush.msra.mxu0 %v129
    %820 = vmatpush.msra.mxu0 %v126
    %821 = vmatpush.msra.mxu0 %v123
    %822 = vmatpush.msra.mxu0 %v120
    %823 = vmatpush.msra.mxu0 %v117
    %824 = vmatpush.msra.mxu0 %v114
    %825 = vmatpush.msra.mxu0 %v111
    %826 = vmatpush.msra.mxu0 %v108
    %827 = vmatpush.msra.mxu0 %v105
    %828 = vmatpush.msra.mxu0 %v102
    %829 = vmatmul.f32.gmra.mxu0 %v809
    %v830 = vpop.f32.mrf.mxu0
    %v831 = vadd.f32 0.0, %v830
    %832 = vdwg.mxu0
    %833 = vmatpush.msra.mxu0 %v148
    %834 = vmatpush.msra.mxu0 %v145
    %835 = vmatpush.msra.mxu0 %v142
    %836 = vmatpush.msra.mxu0 %v139
    %837 = vmatpush.msra.mxu0 %v136
    %838 = vmatpush.msra.mxu0 %v133
    %839 = vmatpush.msra.mxu0 %v130
    %840 = vmatpush.msra.mxu0 %v127
    %841 = vmatpush.msra.mxu0 %v124
    %842 = vmatpush.msra.mxu0 %v121
    %843 = vmatpush.msra.mxu0 %v118
    %844 = vmatpush.msra.mxu0 %v115
    %845 = vmatpush.msra.mxu0 %v112
    %846 = vmatpush.msra.mxu0 %v109
    %847 = vmatpush.msra.mxu0 %v106
    %848 = vmatpush.msra.mxu0 %v103
    %849 = vmatmul.f32.gmra.mxu0 %v809
    %v850 = vpop.f32.mrf.mxu0
    %v851 = vadd.f32 0.0, %v850
    %852 = vdwg.mxu0
    %853 = vmatpush.msra.mxu0 %v149
    %854 = vmatpush.msra.mxu0 %v146
    %855 = vmatpush.msra.mxu0 %v143
    %856 = vmatpush.msra.mxu0 %v140
    %857 = vmatpush.msra.mxu0 %v137
    %858 = vmatpush.msra.mxu0 %v134
    %859 = vmatpush.msra.mxu0 %v131
    %860 = vmatpush.msra.mxu0 %v128
    %861 = vmatpush.msra.mxu0 %v125
    %862 = vmatpush.msra.mxu0 %v122
    %863 = vmatpush.msra.mxu0 %v119
    %864 = vmatpush.msra.mxu0 %v116
    %865 = vmatpush.msra.mxu0 %v113
    %866 = vmatpush.msra.mxu0 %v110
    %867 = vmatpush.msra.mxu0 %v107
    %868 = vmatpush.msra.mxu0 %v104
    %869 = vmatmul.f32.gmra.mxu0 %v809
    %v870 = vpop.f32.mrf.mxu0
    %v871 = vadd.f32 0.0, %v870
    %872 = vdwg.mxu0
    %v873 = vadd.f32 %v810, %v831
    %v874 = vadd.f32 %v811, %v851
    %v875 = vxor.u32 %v873, 2147483648
    %v876 = vxor.u32 %v874, 2147483648
    %v877 = vmul.f32 %v875, 1.442695
    %v878 = vpow.pop %v877
    %v879 = vmul.f32 %v876, 1.442695
    %v880 = vpow.pop %v879
    %v881 = vadd.f32 %v878, 1.0
    %v882 = vadd.f32 %v880, 1.0
    %v883 = vrcp.pop %v881
    %v884 = vmul.f32 %v881, %v883
    %v885 = vsub.f32 1.0, %v884
    %v886 = vmul.f32 %v883, %v885
    %v887 = vadd.f32 %v883, %v886
    %vm888 = vweird.f32 %v881
    %vm889 = vweird.f32 %v883
    %vm890 = vmor %vm888, %vm889
    %v891 = vsel %vm890, %v883, %v887
    %v892 = vand.u32 2147483647, %v881
    %vm893 = vcmp.eq.f32.partialorder %v892, 8.507059e+37
    %v894 = vand.u32 %v881, 2147483648
    %v895 = vor.u32 1.1754944e-38, %v894
    %v896 = vsel %vm893, %v895, %v891
    %v897 = vmul.f32 1.0, %v896
    %v898 = vrcp.pop %v882
    %v899 = vmul.f32 %v882, %v898
    %v900 = vsub.f32 1.0, %v899
    %v901 = vmul.f32 %v898, %v900
    %v902 = vadd.f32 %v898, %v901
    %vm903 = vweird.f32 %v882
    %vm904 = vweird.f32 %v898
    %vm905 = vmor %vm903, %vm904
    %v906 = vsel %vm905, %v898, %v902
    %v907 = vand.u32 2147483647, %v882
    %vm908 = vcmp.eq.f32.partialorder %v907, 8.507059e+37
    %v909 = vand.u32 %v882, 2147483648
    %v910 = vor.u32 1.1754944e-38, %v909
    %v911 = vsel %vm908, %v910, %v906
    %v912 = vmul.f32 1.0, %v911
    %v913 = vadd.f32 %v871, %v152
    %v914 = vmul.f32 %v897, %v913
    %v915 = vadd.f32 %v812, %v914
    %v916 = vtanh.pop %v915
    %v917 = vsub.f32 1.0, %v912
    %v918 = vmul.f32 %v917, %v916
    %v919 = vmul.f32 %v912, %v809
    %v920 = vadd.f32 %v918, %v919
    %v921 = vld [vmem:[#allocation2 + $0x78] sm:$0xff]
    %v922 = vld [vmem:[#allocation2 + $0x80] sm:$0xff]
    %v923 = vld [vmem:[#allocation2 + $0x88] sm:$0xff]
    %924 = vmatpush.msra.mxu0 %v147
    %925 = vmatpush.msra.mxu0 %v144
    %926 = vmatpush.msra.mxu0 %v141
    %927 = vmatpush.msra.mxu0 %v138
    %928 = vmatpush.msra.mxu0 %v135
    %929 = vmatpush.msra.mxu0 %v132
    %930 = vmatpush.msra.mxu0 %v129
    %931 = vmatpush.msra.mxu0 %v126
    %932 = vmatpush.msra.mxu0 %v123
    %933 = vmatpush.msra.mxu0 %v120
    %934 = vmatpush.msra.mxu0 %v117
    %935 = vmatpush.msra.mxu0 %v114
    %936 = vmatpush.msra.mxu0 %v111
    %937 = vmatpush.msra.mxu0 %v108
    %938 = vmatpush.msra.mxu0 %v105
    %939 = vmatpush.msra.mxu0 %v102
    %940 = vmatmul.f32.gmra.mxu0 %v920
    %v941 = vpop.f32.mrf.mxu0
    %v942 = vadd.f32 0.0, %v941
    %943 = vdwg.mxu0
    %944 = vmatpush.msra.mxu0 %v148
    %945 = vmatpush.msra.mxu0 %v145
    %946 = vmatpush.msra.mxu0 %v142
    %947 = vmatpush.msra.mxu0 %v139
    %948 = vmatpush.msra.mxu0 %v136
    %949 = vmatpush.msra.mxu0 %v133
    %950 = vmatpush.msra.mxu0 %v130
    %951 = vmatpush.msra.mxu0 %v127
    %952 = vmatpush.msra.mxu0 %v124
    %953 = vmatpush.msra.mxu0 %v121
    %954 = vmatpush.msra.mxu0 %v118
    %955 = vmatpush.msra.mxu0 %v115
    %956 = vmatpush.msra.mxu0 %v112
    %957 = vmatpush.msra.mxu0 %v109
    %958 = vmatpush.msra.mxu0 %v106
    %959 = vmatpush.msra.mxu0 %v103
    %960 = vmatmul.f32.gmra.mxu0 %v920
    %v961 = vpop.f32.mrf.mxu0
    %v962 = vadd.f32 0.0, %v961
    %963 = vdwg.mxu0
    %964 = vmatpush.msra.mxu0 %v149
    %965 = vmatpush.msra.mxu0 %v146
    %966 = vmatpush.msra.mxu0 %v143
    %967 = vmatpush.msra.mxu0 %v140
    %968 = vmatpush.msra.mxu0 %v137
    %969 = vmatpush.msra.mxu0 %v134
    %970 = vmatpush.msra.mxu0 %v131
    %971 = vmatpush.msra.mxu0 %v128
    %972 = vmatpush.msra.mxu0 %v125
    %973 = vmatpush.msra.mxu0 %v122
    %974 = vmatpush.msra.mxu0 %v119
    %975 = vmatpush.msra.mxu0 %v116
    %976 = vmatpush.msra.mxu0 %v113
    %977 = vmatpush.msra.mxu0 %v110
    %978 = vmatpush.msra.mxu0 %v107
    %979 = vmatpush.msra.mxu0 %v104
    %980 = vmatmul.f32.gmra.mxu0 %v920
    %v981 = vpop.f32.mrf.mxu0
    %v982 = vadd.f32 0.0, %v981
    %983 = vdwg.mxu0
    %v984 = vadd.f32 %v921, %v942
    %v985 = vadd.f32 %v922, %v962
    %v986 = vxor.u32 %v984, 2147483648
    %v987 = vxor.u32 %v985, 2147483648
    %v988 = vmul.f32 %v986, 1.442695
    %v989 = vpow.pop %v988
    %v990 = vmul.f32 %v987, 1.442695
    %v991 = vpow.pop %v990
    %v992 = vadd.f32 %v989, 1.0
    %v993 = vadd.f32 %v991, 1.0
    %v994 = vrcp.pop %v992
    %v995 = vmul.f32 %v992, %v994
    %v996 = vsub.f32 1.0, %v995
    %v997 = vmul.f32 %v994, %v996
    %v998 = vadd.f32 %v994, %v997
    %vm999 = vweird.f32 %v992
    %vm1000 = vweird.f32 %v994
    %vm1001 = vmor %vm999, %vm1000
    %v1002 = vsel %vm1001, %v994, %v998
    %v1003 = vand.u32 2147483647, %v992
    %vm1004 = vcmp.eq.f32.partialorder %v1003, 8.507059e+37
    %v1005 = vand.u32 %v992, 2147483648
    %v1006 = vor.u32 1.1754944e-38, %v1005
    %v1007 = vsel %vm1004, %v1006, %v1002
    %v1008 = vmul.f32 1.0, %v1007
    %v1009 = vrcp.pop %v993
    %v1010 = vmul.f32 %v993, %v1009
    %v1011 = vsub.f32 1.0, %v1010
    %v1012 = vmul.f32 %v1009, %v1011
    %v1013 = vadd.f32 %v1009, %v1012
    %vm1014 = vweird.f32 %v993
    %vm1015 = vweird.f32 %v1009
    %vm1016 = vmor %vm1014, %vm1015
    %v1017 = vsel %vm1016, %v1009, %v1013
    %v1018 = vand.u32 2147483647, %v993
    %vm1019 = vcmp.eq.f32.partialorder %v1018, 8.507059e+37
    %v1020 = vand.u32 %v993, 2147483648
    %v1021 = vor.u32 1.1754944e-38, %v1020
    %v1022 = vsel %vm1019, %v1021, %v1017
    %v1023 = vmul.f32 1.0, %v1022
    %v1024 = vadd.f32 %v982, %v152
    %v1025 = vmul.f32 %v1008, %v1024
    %v1026 = vadd.f32 %v923, %v1025
    %v1027 = vtanh.pop %v1026
    %v1028 = vsub.f32 1.0, %v1023
    %v1029 = vmul.f32 %v1028, %v1027
    %v1030 = vmul.f32 %v1023, %v920
    %v1031 = vadd.f32 %v1029, %v1030
    %v1032 = vld [vmem:[#allocation2 + $0x90] sm:$0xff]
    %v1033 = vld [vmem:[#allocation2 + $0x98] sm:$0xff]
    %v1034 = vld [vmem:[#allocation2 + $0xa0] sm:$0xff]
    %1035 = vmatpush.msra.mxu0 %v147
    %1036 = vmatpush.msra.mxu0 %v144
    %1037 = vmatpush.msra.mxu0 %v141
    %1038 = vmatpush.msra.mxu0 %v138
    %1039 = vmatpush.msra.mxu0 %v135
    %1040 = vmatpush.msra.mxu0 %v132
    %1041 = vmatpush.msra.mxu0 %v129
    %1042 = vmatpush.msra.mxu0 %v126
    %1043 = vmatpush.msra.mxu0 %v123
    %1044 = vmatpush.msra.mxu0 %v120
    %1045 = vmatpush.msra.mxu0 %v117
    %1046 = vmatpush.msra.mxu0 %v114
    %1047 = vmatpush.msra.mxu0 %v111
    %1048 = vmatpush.msra.mxu0 %v108
    %1049 = vmatpush.msra.mxu0 %v105
    %1050 = vmatpush.msra.mxu0 %v102
    %1051 = vmatmul.f32.gmra.mxu0 %v1031
    %v1052 = vpop.f32.mrf.mxu0
    %v1053 = vadd.f32 0.0, %v1052
    %1054 = vdwg.mxu0
    %1055 = vmatpush.msra.mxu0 %v148
    %1056 = vmatpush.msra.mxu0 %v145
    %1057 = vmatpush.msra.mxu0 %v142
    %1058 = vmatpush.msra.mxu0 %v139
    %1059 = vmatpush.msra.mxu0 %v136
    %1060 = vmatpush.msra.mxu0 %v133
    %1061 = vmatpush.msra.mxu0 %v130
    %1062 = vmatpush.msra.mxu0 %v127
    %1063 = vmatpush.msra.mxu0 %v124
    %1064 = vmatpush.msra.mxu0 %v121
    %1065 = vmatpush.msra.mxu0 %v118
    %1066 = vmatpush.msra.mxu0 %v115
    %1067 = vmatpush.msra.mxu0 %v112
    %1068 = vmatpush.msra.mxu0 %v109
    %1069 = vmatpush.msra.mxu0 %v106
    %1070 = vmatpush.msra.mxu0 %v103
    %1071 = vmatmul.f32.gmra.mxu0 %v1031
    %v1072 = vpop.f32.mrf.mxu0
    %v1073 = vadd.f32 0.0, %v1072
    %1074 = vdwg.mxu0
    %1075 = vmatpush.msra.mxu0 %v149
    %1076 = vmatpush.msra.mxu0 %v146
    %1077 = vmatpush.msra.mxu0 %v143
    %1078 = vmatpush.msra.mxu0 %v140
    %1079 = vmatpush.msra.mxu0 %v137
    %1080 = vmatpush.msra.mxu0 %v134
    %1081 = vmatpush.msra.mxu0 %v131
    %1082 = vmatpush.msra.mxu0 %v128
    %1083 = vmatpush.msra.mxu0 %v125
    %1084 = vmatpush.msra.mxu0 %v122
    %1085 = vmatpush.msra.mxu0 %v119
    %1086 = vmatpush.msra.mxu0 %v116
    %1087 = vmatpush.msra.mxu0 %v113
    %1088 = vmatpush.msra.mxu0 %v110
    %1089 = vmatpush.msra.mxu0 %v107
    %1090 = vmatpush.msra.mxu0 %v104
    %1091 = vmatmul.f32.gmra.mxu0 %v1031
    %v1092 = vpop.f32.mrf.mxu0
    %v1093 = vadd.f32 0.0, %v1092
    %1094 = vdwg.mxu0
    %v1095 = vadd.f32 %v1032, %v1053
    %v1096 = vadd.f32 %v1033, %v1073
    %v1097 = vxor.u32 %v1095, 2147483648
    %v1098 = vxor.u32 %v1096, 2147483648
    %v1099 = vmul.f32 %v1097, 1.442695
    %v1100 = vpow.pop %v1099
    %v1101 = vmul.f32 %v1098, 1.442695
    %v1102 = vpow.pop %v1101
    %v1103 = vadd.f32 %v1100, 1.0
    %v1104 = vadd.f32 %v1102, 1.0
    %v1105 = vrcp.pop %v1103
    %v1106 = vmul.f32 %v1103, %v1105
    %v1107 = vsub.f32 1.0, %v1106
    %v1108 = vmul.f32 %v1105, %v1107
    %v1109 = vadd.f32 %v1105, %v1108
    %vm1110 = vweird.f32 %v1103
    %vm1111 = vweird.f32 %v1105
    %vm1112 = vmor %vm1110, %vm1111
    %v1113 = vsel %vm1112, %v1105, %v1109
    %v1114 = vand.u32 2147483647, %v1103
    %vm1115 = vcmp.eq.f32.partialorder %v1114, 8.507059e+37
    %v1116 = vand.u32 %v1103, 2147483648
    %v1117 = vor.u32 1.1754944e-38, %v1116
    %v1118 = vsel %vm1115, %v1117, %v1113
    %v1119 = vmul.f32 1.0, %v1118
    %v1120 = vrcp.pop %v1104
    %v1121 = vmul.f32 %v1104, %v1120
    %v1122 = vsub.f32 1.0, %v1121
    %v1123 = vmul.f32 %v1120, %v1122
    %v1124 = vadd.f32 %v1120, %v1123
    %vm1125 = vweird.f32 %v1104
    %vm1126 = vweird.f32 %v1120
    %vm1127 = vmor %vm1125, %vm1126
    %v1128 = vsel %vm1127, %v1120, %v1124
    %v1129 = vand.u32 2147483647, %v1104
    %vm1130 = vcmp.eq.f32.partialorder %v1129, 8.507059e+37
    %v1131 = vand.u32 %v1104, 2147483648
    %v1132 = vor.u32 1.1754944e-38, %v1131
    %v1133 = vsel %vm1130, %v1132, %v1128
    %v1134 = vmul.f32 1.0, %v1133
    %v1135 = vadd.f32 %v1093, %v152
    %v1136 = vmul.f32 %v1119, %v1135
    %v1137 = vadd.f32 %v1034, %v1136
    %v1138 = vtanh.pop %v1137
    %v1139 = vsub.f32 1.0, %v1134
    %v1140 = vmul.f32 %v1139, %v1138
    %v1141 = vmul.f32 %v1134, %v1031
    %v1142 = vadd.f32 %v1140, %v1141
    %v1143 = vld [vmem:[#allocation2 + $0xa8] sm:$0xff]
    %v1144 = vld [vmem:[#allocation2 + $0xb0] sm:$0xff]
    %v1145 = vld [vmem:[#allocation2 + $0xb8] sm:$0xff]
    %1146 = vmatpush.msra.mxu0 %v147
    %1147 = vmatpush.msra.mxu0 %v144
    %1148 = vmatpush.msra.mxu0 %v141
    %1149 = vmatpush.msra.mxu0 %v138
    %1150 = vmatpush.msra.mxu0 %v135
    %1151 = vmatpush.msra.mxu0 %v132
    %1152 = vmatpush.msra.mxu0 %v129
    %1153 = vmatpush.msra.mxu0 %v126
    %1154 = vmatpush.msra.mxu0 %v123
    %1155 = vmatpush.msra.mxu0 %v120
    %1156 = vmatpush.msra.mxu0 %v117
    %1157 = vmatpush.msra.mxu0 %v114
    %1158 = vmatpush.msra.mxu0 %v111
    %1159 = vmatpush.msra.mxu0 %v108
    %1160 = vmatpush.msra.mxu0 %v105
    %1161 = vmatpush.msra.mxu0 %v102
    %1162 = vmatmul.f32.gmra.mxu0 %v1142
    %v1163 = vpop.f32.mrf.mxu0
    %v1164 = vadd.f32 0.0, %v1163
    %1165 = vdwg.mxu0
    %1166 = vmatpush.msra.mxu0 %v148
    %1167 = vmatpush.msra.mxu0 %v145
    %1168 = vmatpush.msra.mxu0 %v142
    %1169 = vmatpush.msra.mxu0 %v139
    %1170 = vmatpush.msra.mxu0 %v136
    %1171 = vmatpush.msra.mxu0 %v133
    %1172 = vmatpush.msra.mxu0 %v130
    %1173 = vmatpush.msra.mxu0 %v127
    %1174 = vmatpush.msra.mxu0 %v124
    %1175 = vmatpush.msra.mxu0 %v121
    %1176 = vmatpush.msra.mxu0 %v118
    %1177 = vmatpush.msra.mxu0 %v115
    %1178 = vmatpush.msra.mxu0 %v112
    %1179 = vmatpush.msra.mxu0 %v109
    %1180 = vmatpush.msra.mxu0 %v106
    %1181 = vmatpush.msra.mxu0 %v103
    %1182 = vmatmul.f32.gmra.mxu0 %v1142
    %v1183 = vpop.f32.mrf.mxu0
    %v1184 = vadd.f32 0.0, %v1183
    %1185 = vdwg.mxu0
    %1186 = vmatpush.msra.mxu0 %v149
    %1187 = vmatpush.msra.mxu0 %v146
    %1188 = vmatpush.msra.mxu0 %v143
    %1189 = vmatpush.msra.mxu0 %v140
    %1190 = vmatpush.msra.mxu0 %v137
    %1191 = vmatpush.msra.mxu0 %v134
    %1192 = vmatpush.msra.mxu0 %v131
    %1193 = vmatpush.msra.mxu0 %v128
    %1194 = vmatpush.msra.mxu0 %v125
    %1195 = vmatpush.msra.mxu0 %v122
    %1196 = vmatpush.msra.mxu0 %v119
    %1197 = vmatpush.msra.mxu0 %v116
    %1198 = vmatpush.msra.mxu0 %v113
    %1199 = vmatpush.msra.mxu0 %v110
    %1200 = vmatpush.msra.mxu0 %v107
    %1201 = vmatpush.msra.mxu0 %v104
    %1202 = vmatmul.f32.gmra.mxu0 %v1142
    %v1203 = vpop.f32.mrf.mxu0
    %v1204 = vadd.f32 0.0, %v1203
    %1205 = vdwg.mxu0
    %v1206 = vadd.f32 %v1143, %v1164
    %v1207 = vadd.f32 %v1144, %v1184
    %v1208 = vxor.u32 %v1206, 2147483648
    %v1209 = vxor.u32 %v1207, 2147483648
    %v1210 = vmul.f32 %v1208, 1.442695
    %v1211 = vpow.pop %v1210
    %v1212 = vmul.f32 %v1209, 1.442695
    %v1213 = vpow.pop %v1212
    %v1214 = vadd.f32 %v1211, 1.0
    %v1215 = vadd.f32 %v1213, 1.0
    %v1216 = vrcp.pop %v1214
    %v1217 = vmul.f32 %v1214, %v1216
    %v1218 = vsub.f32 1.0, %v1217
    %v1219 = vmul.f32 %v1216, %v1218
    %v1220 = vadd.f32 %v1216, %v1219
    %vm1221 = vweird.f32 %v1214
    %vm1222 = vweird.f32 %v1216
    %vm1223 = vmor %vm1221, %vm1222
    %v1224 = vsel %vm1223, %v1216, %v1220
    %v1225 = vand.u32 2147483647, %v1214
    %vm1226 = vcmp.eq.f32.partialorder %v1225, 8.507059e+37
    %v1227 = vand.u32 %v1214, 2147483648
    %v1228 = vor.u32 1.1754944e-38, %v1227
    %v1229 = vsel %vm1226, %v1228, %v1224
    %v1230 = vmul.f32 1.0, %v1229
    %v1231 = vrcp.pop %v1215
    %v1232 = vmul.f32 %v1215, %v1231
    %v1233 = vsub.f32 1.0, %v1232
    %v1234 = vmul.f32 %v1231, %v1233
    %v1235 = vadd.f32 %v1231, %v1234
    %vm1236 = vweird.f32 %v1215
    %vm1237 = vweird.f32 %v1231
    %vm1238 = vmor %vm1236, %vm1237
    %v1239 = vsel %vm1238, %v1231, %v1235
    %v1240 = vand.u32 2147483647, %v1215
    %vm1241 = vcmp.eq.f32.partialorder %v1240, 8.507059e+37
    %v1242 = vand.u32 %v1215, 2147483648
    %v1243 = vor.u32 1.1754944e-38, %v1242
    %v1244 = vsel %vm1241, %v1243, %v1239
    %v1245 = vmul.f32 1.0, %v1244
    %v1246 = vadd.f32 %v1204, %v152
    %v1247 = vmul.f32 %v1230, %v1246
    %v1248 = vadd.f32 %v1145, %v1247
    %v1249 = vtanh.pop %v1248
    %v1250 = vsub.f32 1.0, %v1245
    %v1251 = vmul.f32 %v1250, %v1249
    %v1252 = vmul.f32 %v1245, %v1142
    %v1253 = vadd.f32 %v1251, %v1252
    %1254 = vst [vmem:[#allocation3] sm:$0xff] %v1253
    // Predicated region
    $region58: #{tpu_custom_call.1} parent=1 // pred_check
      %p1255 = pneg %p97
    $region59: #{tpu_custom_call.1} parent=1 // pred_check_branch
      %1257 = sbr.rel (%p1255) target = $region61
    $region60: #{tpu_custom_call.1} parent=1 // pred_region
      %v1258 = vld [vmem:[#allocation3] sm:$0xff]
      %v1259 = vld [vmem:[#allocation10] sm:$0xff]
      %v1260 = vld [vmem:[#allocation10 + $0x8] sm:$0xff]
      %v1261 = vld [vmem:[#allocation10 + $0x10] sm:$0xff]
      %v1262 = vld [vmem:[#allocation10 + $0x18] sm:$0xff]
      %v1263 = vld [vmem:[#allocation10 + $0x20] sm:$0xff]
      %v1264 = vld [vmem:[#allocation10 + $0x28] sm:$0xff]
      %v1265 = vld [vmem:[#allocation10 + $0x30] sm:$0xff]
      %v1266 = vld [vmem:[#allocation10 + $0x38] sm:$0xff]
      %v1267 = vld [vmem:[#allocation10 + $0x40] sm:$0xff]
      %v1268 = vld [vmem:[#allocation10 + $0x48] sm:$0xff]
      %v1269 = vld [vmem:[#allocation10 + $0x50] sm:$0xff]
      %v1270 = vld [vmem:[#allocation10 + $0x58] sm:$0xff]
      %v1271 = vld [vmem:[#allocation10 + $0x60] sm:$0xff]
      %v1272 = vld [vmem:[#allocation10 + $0x68] sm:$0xff]
      %v1273 = vld [vmem:[#allocation10 + $0x70] sm:$0xff]
      %v1274 = vld [vmem:[#allocation10 + $0x78] sm:$0xff]
      %v1275 = vld [vmem:[%s6] sm:$0x1]
      %v1277 = vperm.slane %v1275, 0
      %1279 = vmatpush.msra.mxu0 %v1274
      %1280 = vmatpush.msra.mxu0 %v1273
      %1281 = vmatpush.msra.mxu0 %v1272
      %1282 = vmatpush.msra.mxu0 %v1271
      %1283 = vmatpush.msra.mxu0 %v1270
      %1284 = vmatpush.msra.mxu0 %v1269
      %1285 = vmatpush.msra.mxu0 %v1268
      %1286 = vmatpush.msra.mxu0 %v1267
      %1287 = vmatpush.msra.mxu0 %v1266
      %1288 = vmatpush.msra.mxu0 %v1265
      %1289 = vmatpush.msra.mxu0 %v1264
      %1290 = vmatpush.msra.mxu0 %v1263
      %1291 = vmatpush.msra.mxu0 %v1262
      %1292 = vmatpush.msra.mxu0 %v1261
      %1293 = vmatpush.msra.mxu0 %v1260
      %1294 = vmatpush.msra.mxu0 %v1259
      %1295 = vmatmul.f32.gmra.mxu0 %v1258
      %v1296 = vpop.f32.mrf.mxu0
      %v1297 = vadd.f32 %v1277, %v1296
      %1298 = vdwg.mxu0
      %v1299 = vtanh.pop %v1297
      %v1300 = vld [vmem:[%s7] sm:$0x1]
      %v1302 = vperm.slane %v1300, 0
      %v1304 = vmul.f32 %v1299, %v1302
      %1305 = vadd.xlane.f32.xlu0 %v1304
      %v1306 = vpop.xlane.xlu0 %1305
      %v1307 = vld [vmem:[#allocation4] sm:$0x1]
      %v1309 = vperm.slane %v1307, 0
      %v1311 = vadd.f32 %v1306, %v1309
      %v1312 = vxor.u32 %v1311, 2147483648
      %v1313 = vmul.f32 %v1312, 1.442695
      %v1314 = vpow.pop %v1313
      %v1315 = vadd.f32 %v1314, 1.0
      %v1316 = vrcp.pop %v1315
      %v1317 = vmul.f32 %v1315, %v1316
      %v1318 = vsub.f32 1.0, %v1317
      %v1319 = vmul.f32 %v1316, %v1318
      %v1320 = vadd.f32 %v1316, %v1319
      %vm1321 = vweird.f32 %v1315
      %vm1322 = vweird.f32 %v1316
      %vm1323 = vmor %vm1321, %vm1322
      %v1324 = vsel %vm1323, %v1316, %v1320
      %v1325 = vand.u32 2147483647, %v1315
      %vm1326 = vcmp.eq.f32.partialorder %v1325, 8.507059e+37
      %v1327 = vand.u32 %v1315, 2147483648
      %v1328 = vor.u32 1.1754944e-38, %v1327
      %v1329 = vsel %vm1326, %v1328, %v1324
      %v1330 = vmul.f32 1.0, %v1329
      %vm1331 = vcmask 7168
      %1332 = vst.msk [vmem:[%s9] sm:$0xff] %vm1331, %v1330
    $region61: #{tpu_custom_call.1} parent=1 // pred_fallthru
      _
    // Predicated region
    $region62: #{tpu_custom_call.1} parent=1 // pred_check
      _
    $region63: #{tpu_custom_call.1} parent=1 // pred_check_branch
      %1334 = sbr.rel (0) target = $region65
    $region64: #{tpu_custom_call.1} parent=1 // pred_region
      _
    $region65: #{tpu_custom_call.1} parent=1 // pred_fallthru
      _
    // Predicated region
    $region66: #{tpu_custom_call.1} parent=1 // pred_check
      _
    $region67: #{tpu_custom_call.1} parent=1 // pred_check_branch
      %1336 = sbr.rel (0) target = $region69
    $region68: #{tpu_custom_call.1} parent=1 // pred_region
      _
    $region69: #{tpu_custom_call.1} parent=1 // pred_fallthru
      _
    %1337 = vsyncpa [#allocation6], 1
    %1338 = vsyncpa [#allocation8], 1
    %1339 = vsyncpa [#allocation11], 1

</llo_original>
